<compile_context>
chip_gen: v5e
topology: v5e:2x2
jax: 0.10.0
libtpu: 0.0.40
codegen_flags: <defaults>
</compile_context>

<pallas_src>
import functools
import math

import jax
import jax.numpy as jnp
from jax import lax
from jax.experimental import pallas as pl
from jax.experimental.pallas import tpu as pltpu


# ----------------------------------------------------------------------------
# Hardware queries (defensive: fall back to conservative values).
# ----------------------------------------------------------------------------
def _vmem_capacity_bytes() -> int:
    try:
        cap = int(pltpu.get_tpu_info().vmem_capacity_bytes)
        if cap > 0:
            return cap
    except Exception:
        pass
    return 64 * 1024 * 1024  # conservative (v7x per-core VMEM)


def _num_tensorcores() -> int:
    try:
        info = pltpu.get_tpu_info()
        for attr in ("num_cores", "core_count", "num_tensorcores",
                     "tensorcore_count"):
            v = getattr(info, attr, None)
            if v:
                return int(v)
    except Exception:
        pass
    try:
        return int(getattr(jax.devices()[0], "num_cores", 1) or 1)
    except Exception:
        return 1


def _batch_block(batch_size: int, num_tensorcores: int) -> int:
    """Batch-chunk size. Only split when >=2 TCs (v7x) can actually run the
    chunks concurrently AND each chunk still fills whole sublane tiles."""
    if num_tensorcores >= 2:
        half = batch_size // 2
        if batch_size >= 16 and batch_size % 2 == 0 and half % 8 == 0:
            return half
    return batch_size


def _gate_permute(w, H):
    """Reorder the leading 4H gate axis from PyTorch (i,f,g,o) to (i,f,o,g)."""
    return jnp.concatenate([w[:H], w[H:2 * H], w[3 * H:4 * H], w[2 * H:3 * H]],
                           axis=0)


# ----------------------------------------------------------------------------
# Pallas kernel: the truly serial LSTM recurrence over one (batch, time) chunk.
# ----------------------------------------------------------------------------
def _lstm_recurrence_kernel(xw_ref, w_hh_hbm_ref, hseq_ref, h_out_ref,
                            c_out_ref, w_hh_vmem, h_carry, c_carry,
                            *, H, k, mm_dtype, store_dtype):
    """Serial LSTM recurrence over one (b_blk, t_chunk) tile.

    xw_ref      : (t_chunk, b_blk, 4H) f32   precomputed x@W_ih^T + (b_ih+b_hh),
                                             gate columns ordered (i, f, o, g)
    w_hh_hbm_ref: (H, 4H)  mm_dtype          pre-transposed W_hh (HBM / ANY)
    hseq_ref    : (t_chunk//k, b_blk, k*H)   hidden states, k steps per row
    h_out_ref   : (b_blk, H) f32             final hidden state
    c_out_ref   : (b_blk, H) f32             final cell state
    w_hh_vmem   : (H, 4H)  mm_dtype          single-buffered VMEM weight copy
    h_carry/c_carry : (b_blk, H) f32         state carried across T-chunks
    """
    t_chunk, b_blk, _ = xw_ref.shape
    n_groups = t_chunk // k
    tc = pl.program_id(1)

    @pl.when(tc == 0)
    def _():
        # Copy the constant recurrent weights once per batch chunk into a
        # single-buffered scratch (avoids the double-buffered BlockSpec copy)
        # and reset the carried state.
        pltpu.sync_copy(w_hh_hbm_ref, w_hh_vmem)
        h_carry[...] = jnp.zeros_like(h_carry)
        c_carry[...] = jnp.zeros_like(c_carry)

    w_hh = w_hh_vmem[...]                   # resident for the whole chunk
    h_f32 = h_carry[...]
    c = c_carry[...]
    h_mm = h_f32.astype(mm_dtype)           # matmul operand, cast once

    # Gates arrive permuted to (i, f, o, g): sigmoid the leading 3H span when
    # it is lane-aligned, otherwise one full-width sigmoid (single EUP push).
    sigmoid_split = (3 * H) % 128 == 0

    def group_step(tg, carry):
        h_mm, h_f32, c = carry
        rows = []
        for j in range(k):                  # static inner unroll (k = 128//H)
            gates = xw_ref[tg * k + j] + jnp.dot(
                h_mm, w_hh, preferred_element_type=jnp.float32)
            if sigmoid_split:
                sg = jax.nn.sigmoid(gates[:, :3 * H])
            else:
                sg = jax.nn.sigmoid(gates)
            i_g = sg[:, 0:H]
            f_g = sg[:, H:2 * H]
            o_g = sg[:, 2 * H:3 * H]
            g_g = jnp.tanh(gates[:, 3 * H:4 * H])
            c = f_g * c + i_g * g_g
            h_f32 = o_g * jnp.tanh(c)
            h_mm = h_f32.astype(mm_dtype)   # reused by next matmul AND store
            rows.append(h_mm.astype(store_dtype))
        # One lane-dense (b_blk, k*H) store per k steps (unmasked when k*H=128).
        hseq_ref[tg] = rows[0] if k == 1 else jnp.concatenate(rows, axis=-1)
        return h_mm, h_f32, c

    # Bounded unroll: full for short chunks, factor 8 for long ones.
    unroll = True if n_groups <= 16 else 8
    h_mm, h_f32, c = lax.fori_loop(0, n_groups, group_step, (h_mm, h_f32, c),
                                   unroll=unroll)

    # Carry state to the next T-chunk of this batch chunk.
    h_carry[...] = h_f32
    c_carry[...] = c

    @pl.when(tc == pl.num_programs(1) - 1)
    def _():
        h_out_ref[...] = h_f32
        c_out_ref[...] = c


# ----------------------------------------------------------------------------
# Wrapper: input projection (parallel), Pallas recurrence, fc + activation.
# ----------------------------------------------------------------------------
def vanilla_lstm_forward(x_btf, params, *, n_hidden, n_outputs,
                         use_bf16_matmul=True, max_t_chunk=None):
    """VanillaLSTM.forward(x) with default constructor/forward args.

    x_btf : (B, T, n_inputs) batch-first, like the PyTorch module.
    Returns (output, (h_n, c_n)) where output is (B*T, n_outputs)
    probabilities and h_n/c_n have shape (1, B, n_hidden) like nn.LSTM.
    """
    B, T, I = x_btf.shape
    H, O = n_hidden, n_outputs
    G = 4 * H
    mm_dtype = jnp.bfloat16 if use_bf16_matmul else jnp.float32
    store_dtype = mm_dtype  # hseq stored in the matmul dtype (bf16 on perf path)

    x = x_btf.astype(jnp.float32)                                  # x.float()
    # Permute gate blocks from PyTorch (i,f,g,o) to (i,f,o,g).
    w_ih = _gate_permute(params["w_ih"].astype(jnp.float32), H)    # (4H, I)
    w_hh = _gate_permute(params["w_hh"].astype(jnp.float32), H)    # (4H, H)
    bias = _gate_permute(
        (params["b_ih"] + params["b_hh"]).astype(jnp.float32), H)  # (4H,)

    # Input projection for ALL timesteps in one parallel matmul, written
    # directly in (T, B, 4H) order: transpose the tiny x (I wide) instead of
    # the 4H-wide result (avoids a full HBM round trip of xW).
    x_tbi = jnp.transpose(x, (1, 0, 2)).reshape(T * B, I)
    xw = jnp.dot(x_tbi.astype(mm_dtype), w_ih.T.astype(mm_dtype),
                 preferred_element_type=jnp.float32) + bias[None, :]
    xw_tbg = xw.reshape(T, B, G)                                   # (T, B, 4H)

    w_hh_t = w_hh.T.astype(mm_dtype)                               # (H, 4H)

    # Lane-group size: pack k = 128//H steps per hidden-sequence row so the
    # per-step store is a full 128-lane (unmasked) store.
    if H < 128 and 128 % H == 0 and T % (128 // H) == 0:
        k = 128 // H
    else:
        k = 1  # TODO(synk): pad T (and mask the tail) to keep lane-dense
               # stores for T not divisible by 128//H.

    num_tc = _num_tensorcores()
    b_blk = _batch_block(B, num_tc)

    vmem_cap = _vmem_capacity_bytes()
    budget = (vmem_cap * 3) // 4            # leave headroom for compiler scratch
    mm_bytes = jnp.dtype(mm_dtype).itemsize
    st_bytes = jnp.dtype(store_dtype).itemsize

    def per_step_bytes(t_chunk):
        xw_blk = t_chunk * b_blk * G * 4                 # f32 input block
        hseq_blk = t_chunk * b_blk * H * st_bytes        # output block
        hc_out = 2 * b_blk * H * 4                       # final h/c blocks
        whh = H * G * mm_bytes                           # single-buffered
        carries = 2 * b_blk * H * 4
        # 2x only for the pipelined (double-buffered) in/out blocks.
        return 2 * (xw_blk + hseq_blk + hc_out) + whh + carries

    # Largest T-chunk (multiple of k, dividing T, <= max_t_chunk) fitting VMEM.
    candidates = [d for d in range(T, 0, -1) if T % d == 0 and d % k == 0]
    t_chunk = candidates[-1]                             # smallest fallback (=k)
    for d in candidates:
        if max_t_chunk is not None and d > max_t_chunk:
            continue
        if per_step_bytes(d) <= budget:
            t_chunk = d
            break

    grid = (B // b_blk, T // t_chunk)
    vmem_limit = int(min(vmem_cap - (2 << 20),
                         max(16 << 20, (per_step_bytes(t_chunk) * 5) // 4
                             + (8 << 20))))

    kernel = functools.partial(_lstm_recurrence_kernel, H=H, k=k,
                               mm_dtype=mm_dtype, store_dtype=store_dtype)

    hseq, h_fin, c_fin = pl.pallas_call(
        kernel,
        grid=grid,
        in_specs=[
            pl.BlockSpec((t_chunk, b_blk, G), lambda i, tc: (tc, i, 0)),
            pl.BlockSpec(memory_space=pl.ANY),           # W_hh: manual 1x copy
        ],
        out_specs=(
            pl.BlockSpec((t_chunk // k, b_blk, k * H), lambda i, tc: (tc, i, 0)),
            pl.BlockSpec((b_blk, H), lambda i, tc: (i, 0)),
            pl.BlockSpec((b_blk, H), lambda i, tc: (i, 0)),
        ),
        out_shape=(
            jax.ShapeDtypeStruct((T // k, B, k * H), store_dtype),
            jax.ShapeDtypeStruct((B, H), jnp.float32),
            jax.ShapeDtypeStruct((B, H), jnp.float32),
        ),
        scratch_shapes=[
            pltpu.VMEM((H, G), mm_dtype),                # resident W_hh
            pltpu.VMEM((b_blk, H), jnp.float32),         # h carried across chunks
            pltpu.VMEM((b_blk, H), jnp.float32),         # c carried across chunks
        ],
        compiler_params=pltpu.CompilerParams(
            dimension_semantics=("parallel", "arbitrary"),
            vmem_limit_bytes=vmem_limit),
    )(xw_tbg, w_hh_t)

    # fc + activation directly on the T-major hidden sequence (no transpose of
    # the full (T,B,H) tensor); only the (.., O) result is reordered back to
    # PyTorch's b*T + t row order (matching .contiguous().view(-1, n_hidden)).
    h_flat = hseq.reshape((T // k) * B * k, H)           # rows: (t_group, b, j)
    logits = jnp.dot(h_flat.astype(mm_dtype),
                     params["w_fc"].T.astype(mm_dtype),
                     preferred_element_type=jnp.float32) + \
        params["b_fc"].astype(jnp.float32)[None, :]
    logits_bt = jnp.transpose(logits.reshape(T // k, B, k, O),
                              (1, 0, 2, 3)).reshape(B * T, O)
    if O == 1:
        out = jax.nn.sigmoid(logits_bt)                  # prob_output, n_outputs==1
    else:
        out = jax.nn.softmax(logits_bt, axis=-1)
    # nn.LSTM returns (num_layers*num_directions, B, H) = (1, B, H) states.
    return out, (h_fin[None, :, :], c_fin[None, :, :])


# ----------------------------------------------------------------------------
# Pure-JAX reference + parameter init (PyTorch gate order i,f,g,o).
# ----------------------------------------------------------------------------
def _reference_forward(x_btf, params, *, n_hidden, n_outputs):
    """Pure-JAX f32 reference mirroring nn.LSTM(batch_first) + fc + sigmoid."""
    B, T, _ = x_btf.shape
    H = n_hidden
    x = x_btf.astype(jnp.float32)
    w_ih, w_hh = params["w_ih"], params["w_hh"]
    bias = params["b_ih"] + params["b_hh"]
    h = jnp.zeros((B, H), jnp.float32)
    c = jnp.zeros((B, H), jnp.float32)
    hs = []
    for t in range(T):
        g = x[:, t, :] @ w_ih.T + h @ w_hh.T + bias
        i_g = jax.nn.sigmoid(g[:, 0:H])
        f_g = jax.nn.sigmoid(g[:, H:2 * H])
        g_g = jnp.tanh(g[:, 2 * H:3 * H])
        o_g = jax.nn.sigmoid(g[:, 3 * H:4 * H])
        c = f_g * c + i_g * g_g
        h = o_g * jnp.tanh(c)
        hs.append(h)
    hseq = jnp.stack(hs, axis=1)                         # (B, T, H)
    logits = hseq.reshape(B * T, H) @ params["w_fc"].T + params["b_fc"]
    out = (jax.nn.sigmoid(logits) if n_outputs == 1
           else jax.nn.softmax(logits, axis=-1))
    return out, (h[None], c[None])


def init_params(key, n_inputs, n_hidden, n_outputs):
    """PyTorch-style uniform(-1/sqrt(H), 1/sqrt(H)) init; gate order i,f,g,o."""
    H, I, O = n_hidden, n_inputs, n_outputs
    ks = jax.random.split(key, 6)
    k_rnn = 1.0 / math.sqrt(H)
    k_fc = 1.0 / math.sqrt(H)
    u = lambda k, shape, s: jax.random.uniform(k, shape, jnp.float32, -s, s)
    return {
        "w_ih": u(ks[0], (4 * H, I), k_rnn),
        "w_hh": u(ks[1], (4 * H, H), k_rnn),
        "b_ih": u(ks[2], (4 * H,), k_rnn),
        "b_hh": u(ks[3], (4 * H,), k_rnn),
        "w_fc": u(ks[4], (O, H), k_fc),
        "b_fc": u(ks[5], (O,), k_fc),
    }


if __name__ == "__main__":
    # batch=2, seq=8, n_inputs=4, n_hidden=32, n_outputs=1
    jax.config.update("jax_default_matmul_precision", "highest")
    B, T, I, H, O = 2, 8, 4, 32, 1

    key = jax.random.PRNGKey(0)
    k_x, k_p = jax.random.split(key)
    x = jax.random.normal(k_x, (B, T, I), dtype=jnp.float32)
    params = init_params(k_p, I, H, O)

    out_ref, (h_ref, c_ref) = _reference_forward(x, params, n_hidden=H,
                                                 n_outputs=O)

    # Exact-math path (f32 matmuls, single T-chunk).
    fwd_f32 = jax.jit(functools.partial(vanilla_lstm_forward, n_hidden=H,
                                        n_outputs=O, use_bf16_matmul=False))
    out32, (h32, c32) = fwd_f32(x, params)
    jax.block_until_ready(out32)
    assert out32.shape == (B * T, O)
    assert float(jnp.max(jnp.abs(out32 - out_ref))) < 1e-2
    assert float(jnp.max(jnp.abs(h32 - h_ref))) < 1e-2
    assert float(jnp.max(jnp.abs(c32 - c_ref))) < 1e-2

    # Exercise the T-chunk streaming path (grid axis "arbitrary" over time,
    # h/c carried in VMEM scratch across chunks).
    fwd_stream = jax.jit(functools.partial(vanilla_lstm_forward, n_hidden=H,
                                           n_outputs=O, use_bf16_matmul=False,
                                           max_t_chunk=4))
    out_s, (h_s, c_s) = fwd_stream(x, params)
    jax.block_until_ready(out_s)
    assert float(jnp.max(jnp.abs(out_s - out_ref))) < 1e-2
    assert float(jnp.max(jnp.abs(h_s - h_ref))) < 1e-2
    assert float(jnp.max(jnp.abs(c_s - c_ref))) < 1e-2

    # Performance path (bf16 MXU operands + bf16 hseq store, f32 state).
    fwd_bf16 = jax.jit(functools.partial(vanilla_lstm_forward, n_hidden=H,
                                         n_outputs=O, use_bf16_matmul=True))
    out16, (h16, c16) = fwd_bf16(x, params)
    jax.block_until_ready(out16)
    jax.block_until_ready(h16)
    jax.block_until_ready(c16)
    assert out16.shape == (B * T, O)
    assert bool(jnp.all((out16 >= 0.0) & (out16 <= 1.0)))
    assert float(jnp.max(jnp.abs(out16 - out_ref))) < 1.5e-1

    # TODO(synk): embedding-bag preprocessing, packed/variable-length sequences
    # (seq_lengths), dropout (p>0), and multi-layer/bidirectional LSTM stacks
    # are config branches not exercised by the default constructor args.
    print("KERNEL_OK")
</pallas_src>

<mosaic_0001>
module attributes {stable_mosaic.version = 11 : i64} {
  func.func @_lstm_recurrence_kernel(%arg0: i32, %arg1: i32, %arg2: memref<8x2x128xf32, #tpu.memory_space<vmem>>, %arg3: memref<32x128xf32, #tpu.memory_space<any>>, %arg4: memref<2x2x128xf32, #tpu.memory_space<vmem>>, %arg5: memref<2x32xf32, #tpu.memory_space<vmem>>, %arg6: memref<2x32xf32, #tpu.memory_space<vmem>>, %arg7: memref<32x128xf32, #tpu.memory_space<vmem>>, %arg8: memref<2x32xf32, #tpu.memory_space<vmem>>, %arg9: memref<2x32xf32, #tpu.memory_space<vmem>>) attributes {dimension_semantics = [#tpu.dimension_semantics<parallel>, #tpu.dimension_semantics<arbitrary>], iteration_bounds = array<i64: 1, 1>, scalar_prefetch = 0 : i64, scratch_operands = 3 : i64, tpu.core_type = #tpu.core_type<tc>, window_params = [{transform_indices = @transform_0, window_bounds = array<i64: 8, 2, 128>}, {}, {transform_indices = @transform_2, window_bounds = array<i64: 2, 2, 128>}, {transform_indices = @transform_3, window_bounds = array<i64: 2, 32>}, {transform_indices = @transform_4, window_bounds = array<i64: 2, 32>}]} {
    %c0_i32 = arith.constant 0 : i32
    %0 = arith.cmpi eq, %arg1, %c0_i32 : i32
    %1 = arith.extui %0 : i1 to i32
    %c0_i32_0 = arith.constant 0 : i32
    %2 = arith.cmpi ne, %1, %c0_i32_0 : i32
    scf.if %2 {
      "tpu.region"() ({
        %201 = tpu.sem_alloc : memref<!tpu.dma_semaphore, #tpu.memory_space<semaphore_mem>>
        tpu.enqueue_dma source(%arg3 : memref<32x128xf32, #tpu.memory_space<any>>) target(%arg7 : memref<32x128xf32, #tpu.memory_space<vmem>>) target_semaphore(%201 : memref<!tpu.dma_semaphore, #tpu.memory_space<semaphore_mem>>)
        tpu.wait_dma2 semaphore(%201 : memref<!tpu.dma_semaphore, #tpu.memory_space<semaphore_mem>>) src(%arg3 : memref<32x128xf32, #tpu.memory_space<any>>) dst(%arg7 : memref<32x128xf32, #tpu.memory_space<vmem>>)
        tpu.yield
      }) : () -> ()
      %cst_62 = arith.constant 0.000000e+00 : f32
      %197 = vector.broadcast %cst_62 : f32 to vector<2x32xf32>
      %c0_63 = arith.constant 0 : index
      %c0_64 = arith.constant 0 : index
      %198 = vector.load %arg8[%c0_63, %c0_64] : memref<2x32xf32, #tpu.memory_space<vmem>>, vector<2x32xf32>
      tpu.vector_store %arg8[%c0_63, %c0_64], %197 {strides = array<i32>} : memref<2x32xf32, #tpu.memory_space<vmem>>, vector<2x32xf32>,
      %cst_65 = arith.constant 0.000000e+00 : f32
      %199 = vector.broadcast %cst_65 : f32 to vector<2x32xf32>
      %c0_66 = arith.constant 0 : index
      %c0_67 = arith.constant 0 : index
      %200 = vector.load %arg9[%c0_66, %c0_67] : memref<2x32xf32, #tpu.memory_space<vmem>>, vector<2x32xf32>
      tpu.vector_store %arg9[%c0_66, %c0_67], %199 {strides = array<i32>} : memref<2x32xf32, #tpu.memory_space<vmem>>, vector<2x32xf32>,
    } else {
    }
    %c0 = arith.constant 0 : index
    %c0_1 = arith.constant 0 : index
    %3 = vector.load %arg7[%c0, %c0_1] : memref<32x128xf32, #tpu.memory_space<vmem>>, vector<32x128xf32>
    %c0_2 = arith.constant 0 : index
    %c0_3 = arith.constant 0 : index
    %4 = vector.load %arg8[%c0_2, %c0_3] : memref<2x32xf32, #tpu.memory_space<vmem>>, vector<2x32xf32>
    %c0_4 = arith.constant 0 : index
    %c0_5 = arith.constant 0 : index
    %5 = vector.load %arg9[%c0_4, %c0_5] : memref<2x32xf32, #tpu.memory_space<vmem>>, vector<2x32xf32>
    %c0_i32_6 = arith.constant 0 : i32
    %c4_i32 = arith.constant 4 : i32
    %6 = arith.muli %c0_i32_6, %c4_i32 : i32
    %c0_i32_7 = arith.constant 0 : i32
    %7 = arith.addi %6, %c0_i32_7 : i32
    %8 = arith.index_cast %7 : i32 to index
    %c0_8 = arith.constant 0 : index
    %c0_9 = arith.constant 0 : index
    %9 = vector.load %arg2[%8, %c0_8, %c0_9] : memref<8x2x128xf32, #tpu.memory_space<vmem>>, vector<1x2x128xf32>
    %10 = vector.shape_cast %9 : vector<1x2x128xf32> to vector<2x128xf32>
    %cst = arith.constant dense<0.000000e+00> : vector<2x128xf32>
    %11 = tpu.matmul %4, %3, %cst {dimension_numbers = #tpu.dot_dimension_numbers<[1], [0], [0], [1], [0, 0, 1, 1], [], []>, precision = #tpu.contract_precision<fp32>} : vector<2x32xf32>, vector<32x128xf32>, vector<2x128xf32> -> vector<2x128xf32>
    %12 = arith.addf %10, %11 : vector<2x128xf32>
    %13 = arith.negf %12 : vector<2x128xf32>
    %14 = math.exp %13 : vector<2x128xf32>
    %cst_10 = arith.constant 1.000000e+00 : f32
    %15 = vector.broadcast %cst_10 : f32 to vector<2x128xf32>
    %16 = arith.addf %15, %14 : vector<2x128xf32>
    %17 = arith.divf %15, %16 : vector<2x128xf32>
    %18 = vector.extract_strided_slice %17 {offsets = [0, 0], sizes = [2, 32], strides = [1, 1]} : vector<2x128xf32> to vector<2x32xf32>
    %19 = vector.extract_strided_slice %17 {offsets = [0, 32], sizes = [2, 32], strides = [1, 1]} : vector<2x128xf32> to vector<2x32xf32>
    %20 = vector.extract_strided_slice %17 {offsets = [0, 64], sizes = [2, 32], strides = [1, 1]} : vector<2x128xf32> to vector<2x32xf32>
    %21 = vector.extract_strided_slice %12 {offsets = [0, 96], sizes = [2, 32], strides = [1, 1]} : vector<2x128xf32> to vector<2x32xf32>
    %22 = math.tanh %21 : vector<2x32xf32>
    %23 = arith.mulf %19, %5 : vector<2x32xf32>
    %24 = arith.mulf %18, %22 : vector<2x32xf32>
    %25 = arith.addf %23, %24 : vector<2x32xf32>
    %26 = math.tanh %25 : vector<2x32xf32>
    %27 = arith.mulf %20, %26 : vector<2x32xf32>
    %c4_i32_11 = arith.constant 4 : i32
    %28 = arith.muli %c0_i32_6, %c4_i32_11 : i32
    %c1_i32 = arith.constant 1 : i32
    %29 = arith.addi %28, %c1_i32 : i32
    %30 = arith.index_cast %29 : i32 to index
    %c0_12 = arith.constant 0 : index
    %c0_13 = arith.constant 0 : index
    %31 = vector.load %arg2[%30, %c0_12, %c0_13] : memref<8x2x128xf32, #tpu.memory_space<vmem>>, vector<1x2x128xf32>
    %32 = vector.shape_cast %31 : vector<1x2x128xf32> to vector<2x128xf32>
    %cst_14 = arith.constant dense<0.000000e+00> : vector<2x128xf32>
    %33 = tpu.matmul %27, %3, %cst_14 {dimension_numbers = #tpu.dot_dimension_numbers<[1], [0], [0], [1], [0, 0, 1, 1], [], []>, precision = #tpu.contract_precision<fp32>} : vector<2x32xf32>, vector<32x128xf32>, vector<2x128xf32> -> vector<2x128xf32>
    %34 = arith.addf %32, %33 : vector<2x128xf32>
    %35 = arith.negf %34 : vector<2x128xf32>
    %36 = math.exp %35 : vector<2x128xf32>
    %cst_15 = arith.constant 1.000000e+00 : f32
    %37 = vector.broadcast %cst_15 : f32 to vector<2x128xf32>
    %38 = arith.addf %37, %36 : vector<2x128xf32>
    %39 = arith.divf %37, %38 : vector<2x128xf32>
    %40 = vector.extract_strided_slice %39 {offsets = [0, 0], sizes = [2, 32], strides = [1, 1]} : vector<2x128xf32> to vector<2x32xf32>
    %41 = vector.extract_strided_slice %39 {offsets = [0, 32], sizes = [2, 32], strides = [1, 1]} : vector<2x128xf32> to vector<2x32xf32>
    %42 = vector.extract_strided_slice %39 {offsets = [0, 64], sizes = [2, 32], strides = [1, 1]} : vector<2x128xf32> to vector<2x32xf32>
    %43 = vector.extract_strided_slice %34 {offsets = [0, 96], sizes = [2, 32], strides = [1, 1]} : vector<2x128xf32> to vector<2x32xf32>
    %44 = math.tanh %43 : vector<2x32xf32>
    %45 = arith.mulf %41, %25 : vector<2x32xf32>
    %46 = arith.mulf %40, %44 : vector<2x32xf32>
    %47 = arith.addf %45, %46 : vector<2x32xf32>
    %48 = math.tanh %47 : vector<2x32xf32>
    %49 = arith.mulf %42, %48 : vector<2x32xf32>
    %c4_i32_16 = arith.constant 4 : i32
    %50 = arith.muli %c0_i32_6, %c4_i32_16 : i32
    %c2_i32 = arith.constant 2 : i32
    %51 = arith.addi %50, %c2_i32 : i32
    %52 = arith.index_cast %51 : i32 to index
    %c0_17 = arith.constant 0 : index
    %c0_18 = arith.constant 0 : index
    %53 = vector.load %arg2[%52, %c0_17, %c0_18] : memref<8x2x128xf32, #tpu.memory_space<vmem>>, vector<1x2x128xf32>
    %54 = vector.shape_cast %53 : vector<1x2x128xf32> to vector<2x128xf32>
    %cst_19 = arith.constant dense<0.000000e+00> : vector<2x128xf32>
    %55 = tpu.matmul %49, %3, %cst_19 {dimension_numbers = #tpu.dot_dimension_numbers<[1], [0], [0], [1], [0, 0, 1, 1], [], []>, precision = #tpu.contract_precision<fp32>} : vector<2x32xf32>, vector<32x128xf32>, vector<2x128xf32> -> vector<2x128xf32>
    %56 = arith.addf %54, %55 : vector<2x128xf32>
    %57 = arith.negf %56 : vector<2x128xf32>
    %58 = math.exp %57 : vector<2x128xf32>
    %cst_20 = arith.constant 1.000000e+00 : f32
    %59 = vector.broadcast %cst_20 : f32 to vector<2x128xf32>
    %60 = arith.addf %59, %58 : vector<2x128xf32>
    %61 = arith.divf %59, %60 : vector<2x128xf32>
    %62 = vector.extract_strided_slice %61 {offsets = [0, 0], sizes = [2, 32], strides = [1, 1]} : vector<2x128xf32> to vector<2x32xf32>
    %63 = vector.extract_strided_slice %61 {offsets = [0, 32], sizes = [2, 32], strides = [1, 1]} : vector<2x128xf32> to vector<2x32xf32>
    %64 = vector.extract_strided_slice %61 {offsets = [0, 64], sizes = [2, 32], strides = [1, 1]} : vector<2x128xf32> to vector<2x32xf32>
    %65 = vector.extract_strided_slice %56 {offsets = [0, 96], sizes = [2, 32], strides = [1, 1]} : vector<2x128xf32> to vector<2x32xf32>
    %66 = math.tanh %65 : vector<2x32xf32>
    %67 = arith.mulf %63, %47 : vector<2x32xf32>
    %68 = arith.mulf %62, %66 : vector<2x32xf32>
    %69 = arith.addf %67, %68 : vector<2x32xf32>
    %70 = math.tanh %69 : vector<2x32xf32>
    %71 = arith.mulf %64, %70 : vector<2x32xf32>
    %c4_i32_21 = arith.constant 4 : i32
    %72 = arith.muli %c0_i32_6, %c4_i32_21 : i32
    %c3_i32 = arith.constant 3 : i32
    %73 = arith.addi %72, %c3_i32 : i32
    %74 = arith.index_cast %73 : i32 to index
    %c0_22 = arith.constant 0 : index
    %c0_23 = arith.constant 0 : index
    %75 = vector.load %arg2[%74, %c0_22, %c0_23] : memref<8x2x128xf32, #tpu.memory_space<vmem>>, vector<1x2x128xf32>
    %76 = vector.shape_cast %75 : vector<1x2x128xf32> to vector<2x128xf32>
    %cst_24 = arith.constant dense<0.000000e+00> : vector<2x128xf32>
    %77 = tpu.matmul %71, %3, %cst_24 {dimension_numbers = #tpu.dot_dimension_numbers<[1], [0], [0], [1], [0, 0, 1, 1], [], []>, precision = #tpu.contract_precision<fp32>} : vector<2x32xf32>, vector<32x128xf32>, vector<2x128xf32> -> vector<2x128xf32>
    %78 = arith.addf %76, %77 : vector<2x128xf32>
    %79 = arith.negf %78 : vector<2x128xf32>
    %80 = math.exp %79 : vector<2x128xf32>
    %cst_25 = arith.constant 1.000000e+00 : f32
    %81 = vector.broadcast %cst_25 : f32 to vector<2x128xf32>
    %82 = arith.addf %81, %80 : vector<2x128xf32>
    %83 = arith.divf %81, %82 : vector<2x128xf32>
    %84 = vector.extract_strided_slice %83 {offsets = [0, 0], sizes = [2, 32], strides = [1, 1]} : vector<2x128xf32> to vector<2x32xf32>
    %85 = vector.extract_strided_slice %83 {offsets = [0, 32], sizes = [2, 32], strides = [1, 1]} : vector<2x128xf32> to vector<2x32xf32>
    %86 = vector.extract_strided_slice %83 {offsets = [0, 64], sizes = [2, 32], strides = [1, 1]} : vector<2x128xf32> to vector<2x32xf32>
    %87 = vector.extract_strided_slice %78 {offsets = [0, 96], sizes = [2, 32], strides = [1, 1]} : vector<2x128xf32> to vector<2x32xf32>
    %88 = math.tanh %87 : vector<2x32xf32>
    %89 = arith.mulf %85, %69 : vector<2x32xf32>
    %90 = arith.mulf %84, %88 : vector<2x32xf32>
    %91 = arith.addf %89, %90 : vector<2x32xf32>
    %92 = math.tanh %91 : vector<2x32xf32>
    %93 = arith.mulf %86, %92 : vector<2x32xf32>
    %94 = tpu.concatenate %27, %49, %71, %93 in 1 : vector<2x32xf32>, vector<2x32xf32>, vector<2x32xf32>, vector<2x32xf32> -> vector<2x128xf32>
    %95 = arith.index_cast %c0_i32_6 : i32 to index
    %c0_26 = arith.constant 0 : index
    %c0_27 = arith.constant 0 : index
    %96 = vector.load %arg4[%95, %c0_26, %c0_27] : memref<2x2x128xf32, #tpu.memory_space<vmem>>, vector<1x2x128xf32>
    %97 = vector.shape_cast %96 : vector<1x2x128xf32> to vector<2x128xf32>
    %98 = vector.shape_cast %94 : vector<2x128xf32> to vector<1x2x128xf32>
    tpu.vector_store %arg4[%95, %c0_26, %c0_27], %98 {strides = array<i32>} : memref<2x2x128xf32, #tpu.memory_space<vmem>>, vector<1x2x128xf32>,
    %c1_i32_28 = arith.constant 1 : i32
    %c4_i32_29 = arith.constant 4 : i32
    %99 = arith.muli %c1_i32_28, %c4_i32_29 : i32
    %c0_i32_30 = arith.constant 0 : i32
    %100 = arith.addi %99, %c0_i32_30 : i32
    %101 = arith.index_cast %100 : i32 to index
    %c0_31 = arith.constant 0 : index
    %c0_32 = arith.constant 0 : index
    %102 = vector.load %arg2[%101, %c0_31, %c0_32] : memref<8x2x128xf32, #tpu.memory_space<vmem>>, vector<1x2x128xf32>
    %103 = vector.shape_cast %102 : vector<1x2x128xf32> to vector<2x128xf32>
    %cst_33 = arith.constant dense<0.000000e+00> : vector<2x128xf32>
    %104 = tpu.matmul %93, %3, %cst_33 {dimension_numbers = #tpu.dot_dimension_numbers<[1], [0], [0], [1], [0, 0, 1, 1], [], []>, precision = #tpu.contract_precision<fp32>} : vector<2x32xf32>, vector<32x128xf32>, vector<2x128xf32> -> vector<2x128xf32>
    %105 = arith.addf %103, %104 : vector<2x128xf32>
    %106 = arith.negf %105 : vector<2x128xf32>
    %107 = math.exp %106 : vector<2x128xf32>
    %cst_34 = arith.constant 1.000000e+00 : f32
    %108 = vector.broadcast %cst_34 : f32 to vector<2x128xf32>
    %109 = arith.addf %108, %107 : vector<2x128xf32>
    %110 = arith.divf %108, %109 : vector<2x128xf32>
    %111 = vector.extract_strided_slice %110 {offsets = [0, 0], sizes = [2, 32], strides = [1, 1]} : vector<2x128xf32> to vector<2x32xf32>
    %112 = vector.extract_strided_slice %110 {offsets = [0, 32], sizes = [2, 32], strides = [1, 1]} : vector<2x128xf32> to vector<2x32xf32>
    %113 = vector.extract_strided_slice %110 {offsets = [0, 64], sizes = [2, 32], strides = [1, 1]} : vector<2x128xf32> to vector<2x32xf32>
    %114 = vector.extract_strided_slice %105 {offsets = [0, 96], sizes = [2, 32], strides = [1, 1]} : vector<2x128xf32> to vector<2x32xf32>
    %115 = math.tanh %114 : vector<2x32xf32>
    %116 = arith.mulf %112, %91 : vector<2x32xf32>
    %117 = arith.mulf %111, %115 : vector<2x32xf32>
    %118 = arith.addf %116, %117 : vector<2x32xf32>
    %119 = math.tanh %118 : vector<2x32xf32>
    %120 = arith.mulf %113, %119 : vector<2x32xf32>
    %c4_i32_35 = arith.constant 4 : i32
    %121 = arith.muli %c1_i32_28, %c4_i32_35 : i32
    %c1_i32_36 = arith.constant 1 : i32
    %122 = arith.addi %121, %c1_i32_36 : i32
    %123 = arith.index_cast %122 : i32 to index
    %c0_37 = arith.constant 0 : index
    %c0_38 = arith.constant 0 : index
    %124 = vector.load %arg2[%123, %c0_37, %c0_38] : memref<8x2x128xf32, #tpu.memory_space<vmem>>, vector<1x2x128xf32>
    %125 = vector.shape_cast %124 : vector<1x2x128xf32> to vector<2x128xf32>
    %cst_39 = arith.constant dense<0.000000e+00> : vector<2x128xf32>
    %126 = tpu.matmul %120, %3, %cst_39 {dimension_numbers = #tpu.dot_dimension_numbers<[1], [0], [0], [1], [0, 0, 1, 1], [], []>, precision = #tpu.contract_precision<fp32>} : vector<2x32xf32>, vector<32x128xf32>, vector<2x128xf32> -> vector<2x128xf32>
    %127 = arith.addf %125, %126 : vector<2x128xf32>
    %128 = arith.negf %127 : vector<2x128xf32>
    %129 = math.exp %128 : vector<2x128xf32>
    %cst_40 = arith.constant 1.000000e+00 : f32
    %130 = vector.broadcast %cst_40 : f32 to vector<2x128xf32>
    %131 = arith.addf %130, %129 : vector<2x128xf32>
    %132 = arith.divf %130, %131 : vector<2x128xf32>
    %133 = vector.extract_strided_slice %132 {offsets = [0, 0], sizes = [2, 32], strides = [1, 1]} : vector<2x128xf32> to vector<2x32xf32>
    %134 = vector.extract_strided_slice %132 {offsets = [0, 32], sizes = [2, 32], strides = [1, 1]} : vector<2x128xf32> to vector<2x32xf32>
    %135 = vector.extract_strided_slice %132 {offsets = [0, 64], sizes = [2, 32], strides = [1, 1]} : vector<2x128xf32> to vector<2x32xf32>
    %136 = vector.extract_strided_slice %127 {offsets = [0, 96], sizes = [2, 32], strides = [1, 1]} : vector<2x128xf32> to vector<2x32xf32>
    %137 = math.tanh %136 : vector<2x32xf32>
    %138 = arith.mulf %134, %118 : vector<2x32xf32>
    %139 = arith.mulf %133, %137 : vector<2x32xf32>
    %140 = arith.addf %138, %139 : vector<2x32xf32>
    %141 = math.tanh %140 : vector<2x32xf32>
    %142 = arith.mulf %135, %141 : vector<2x32xf32>
    %c4_i32_41 = arith.constant 4 : i32
    %143 = arith.muli %c1_i32_28, %c4_i32_41 : i32
    %c2_i32_42 = arith.constant 2 : i32
    %144 = arith.addi %143, %c2_i32_42 : i32
    %145 = arith.index_cast %144 : i32 to index
    %c0_43 = arith.constant 0 : index
    %c0_44 = arith.constant 0 : index
    %146 = vector.load %arg2[%145, %c0_43, %c0_44] : memref<8x2x128xf32, #tpu.memory_space<vmem>>, vector<1x2x128xf32>
    %147 = vector.shape_cast %146 : vector<1x2x128xf32> to vector<2x128xf32>
    %cst_45 = arith.constant dense<0.000000e+00> : vector<2x128xf32>
    %148 = tpu.matmul %142, %3, %cst_45 {dimension_numbers = #tpu.dot_dimension_numbers<[1], [0], [0], [1], [0, 0, 1, 1], [], []>, precision = #tpu.contract_precision<fp32>} : vector<2x32xf32>, vector<32x128xf32>, vector<2x128xf32> -> vector<2x128xf32>
    %149 = arith.addf %147, %148 : vector<2x128xf32>
    %150 = arith.negf %149 : vector<2x128xf32>
    %151 = math.exp %150 : vector<2x128xf32>
    %cst_46 = arith.constant 1.000000e+00 : f32
    %152 = vector.broadcast %cst_46 : f32 to vector<2x128xf32>
    %153 = arith.addf %152, %151 : vector<2x128xf32>
    %154 = arith.divf %152, %153 : vector<2x128xf32>
    %155 = vector.extract_strided_slice %154 {offsets = [0, 0], sizes = [2, 32], strides = [1, 1]} : vector<2x128xf32> to vector<2x32xf32>
    %156 = vector.extract_strided_slice %154 {offsets = [0, 32], sizes = [2, 32], strides = [1, 1]} : vector<2x128xf32> to vector<2x32xf32>
    %157 = vector.extract_strided_slice %154 {offsets = [0, 64], sizes = [2, 32], strides = [1, 1]} : vector<2x128xf32> to vector<2x32xf32>
    %158 = vector.extract_strided_slice %149 {offsets = [0, 96], sizes = [2, 32], strides = [1, 1]} : vector<2x128xf32> to vector<2x32xf32>
    %159 = math.tanh %158 : vector<2x32xf32>
    %160 = arith.mulf %156, %140 : vector<2x32xf32>
    %161 = arith.mulf %155, %159 : vector<2x32xf32>
    %162 = arith.addf %160, %161 : vector<2x32xf32>
    %163 = math.tanh %162 : vector<2x32xf32>
    %164 = arith.mulf %157, %163 : vector<2x32xf32>
    %c4_i32_47 = arith.constant 4 : i32
    %165 = arith.muli %c1_i32_28, %c4_i32_47 : i32
    %c3_i32_48 = arith.constant 3 : i32
    %166 = arith.addi %165, %c3_i32_48 : i32
    %167 = arith.index_cast %166 : i32 to index
    %c0_49 = arith.constant 0 : index
    %c0_50 = arith.constant 0 : index
    %168 = vector.load %arg2[%167, %c0_49, %c0_50] : memref<8x2x128xf32, #tpu.memory_space<vmem>>, vector<1x2x128xf32>
    %169 = vector.shape_cast %168 : vector<1x2x128xf32> to vector<2x128xf32>
    %cst_51 = arith.constant dense<0.000000e+00> : vector<2x128xf32>
    %170 = tpu.matmul %164, %3, %cst_51 {dimension_numbers = #tpu.dot_dimension_numbers<[1], [0], [0], [1], [0, 0, 1, 1], [], []>, precision = #tpu.contract_precision<fp32>} : vector<2x32xf32>, vector<32x128xf32>, vector<2x128xf32> -> vector<2x128xf32>
    %171 = arith.addf %169, %170 : vector<2x128xf32>
    %172 = arith.negf %171 : vector<2x128xf32>
    %173 = math.exp %172 : vector<2x128xf32>
    %cst_52 = arith.constant 1.000000e+00 : f32
    %174 = vector.broadcast %cst_52 : f32 to vector<2x128xf32>
    %175 = arith.addf %174, %173 : vector<2x128xf32>
    %176 = arith.divf %174, %175 : vector<2x128xf32>
    %177 = vector.extract_strided_slice %176 {offsets = [0, 0], sizes = [2, 32], strides = [1, 1]} : vector<2x128xf32> to vector<2x32xf32>
    %178 = vector.extract_strided_slice %176 {offsets = [0, 32], sizes = [2, 32], strides = [1, 1]} : vector<2x128xf32> to vector<2x32xf32>
    %179 = vector.extract_strided_slice %176 {offsets = [0, 64], sizes = [2, 32], strides = [1, 1]} : vector<2x128xf32> to vector<2x32xf32>
    %180 = vector.extract_strided_slice %171 {offsets = [0, 96], sizes = [2, 32], strides = [1, 1]} : vector<2x128xf32> to vector<2x32xf32>
    %181 = math.tanh %180 : vector<2x32xf32>
    %182 = arith.mulf %178, %162 : vector<2x32xf32>
    %183 = arith.mulf %177, %181 : vector<2x32xf32>
    %184 = arith.addf %182, %183 : vector<2x32xf32>
    %185 = math.tanh %184 : vector<2x32xf32>
    %186 = arith.mulf %179, %185 : vector<2x32xf32>
    %187 = tpu.concatenate %120, %142, %164, %186 in 1 : vector<2x32xf32>, vector<2x32xf32>, vector<2x32xf32>, vector<2x32xf32> -> vector<2x128xf32>
    %188 = arith.index_cast %c1_i32_28 : i32 to index
    %c0_53 = arith.constant 0 : index
    %c0_54 = arith.constant 0 : index
    %189 = vector.load %arg4[%188, %c0_53, %c0_54] : memref<2x2x128xf32, #tpu.memory_space<vmem>>, vector<1x2x128xf32>
    %190 = vector.shape_cast %189 : vector<1x2x128xf32> to vector<2x128xf32>
    %191 = vector.shape_cast %187 : vector<2x128xf32> to vector<1x2x128xf32>
    tpu.vector_store %arg4[%188, %c0_53, %c0_54], %191 {strides = array<i32>} : memref<2x2x128xf32, #tpu.memory_space<vmem>>, vector<1x2x128xf32>,
    %c2_i32_55 = arith.constant 2 : i32
    %c0_56 = arith.constant 0 : index
    %c0_57 = arith.constant 0 : index
    %192 = vector.load %arg8[%c0_56, %c0_57] : memref<2x32xf32, #tpu.memory_space<vmem>>, vector<2x32xf32>
    tpu.vector_store %arg8[%c0_56, %c0_57], %186 {strides = array<i32>} : memref<2x32xf32, #tpu.memory_space<vmem>>, vector<2x32xf32>,
    %c0_58 = arith.constant 0 : index
    %c0_59 = arith.constant 0 : index
    %193 = vector.load %arg9[%c0_58, %c0_59] : memref<2x32xf32, #tpu.memory_space<vmem>>, vector<2x32xf32>
    tpu.vector_store %arg9[%c0_58, %c0_59], %184 {strides = array<i32>} : memref<2x32xf32, #tpu.memory_space<vmem>>, vector<2x32xf32>,
    %c0_i32_60 = arith.constant 0 : i32
    %194 = arith.cmpi eq, %arg1, %c0_i32_60 : i32
    %195 = arith.extui %194 : i1 to i32
    %c0_i32_61 = arith.constant 0 : i32
    %196 = arith.cmpi ne, %195, %c0_i32_61 : i32
    scf.if %196 {
      %c0_62 = arith.constant 0 : index
      %c0_63 = arith.constant 0 : index
      %197 = vector.load %arg5[%c0_62, %c0_63] : memref<2x32xf32, #tpu.memory_space<vmem>>, vector<2x32xf32>
      tpu.vector_store %arg5[%c0_62, %c0_63], %186 {strides = array<i32>} : memref<2x32xf32, #tpu.memory_space<vmem>>, vector<2x32xf32>,
      %c0_64 = arith.constant 0 : index
      %c0_65 = arith.constant 0 : index
      %198 = vector.load %arg6[%c0_64, %c0_65] : memref<2x32xf32, #tpu.memory_space<vmem>>, vector<2x32xf32>
      tpu.vector_store %arg6[%c0_64, %c0_65], %184 {strides = array<i32>} : memref<2x32xf32, #tpu.memory_space<vmem>>, vector<2x32xf32>,
    } else {
    }
    return
  }
  func.func @transform_0(%arg0: i32, %arg1: i32) -> (i32, i32, i32) {
    %c0_i32 = arith.constant 0 : i32
    %c0_i32_0 = arith.constant 0 : i32
    return %arg1, %arg0, %c0_i32 : i32, i32, i32
  }
  func.func @transform_2(%arg0: i32, %arg1: i32) -> (i32, i32, i32) {
    %c0_i32 = arith.constant 0 : i32
    %c0_i32_0 = arith.constant 0 : i32
    return %arg1, %arg0, %c0_i32 : i32, i32, i32
  }
  func.func @transform_3(%arg0: i32, %arg1: i32) -> (i32, i32) {
    %c0_i32 = arith.constant 0 : i32
    %c0_i32_0 = arith.constant 0 : i32
    return %arg0, %c0_i32 : i32, i32
  }
  func.func @transform_4(%arg0: i32, %arg1: i32) -> (i32, i32) {
    %c0_i32 = arith.constant 0 : i32
    %c0_i32_0 = arith.constant 0 : i32
    return %arg0, %c0_i32 : i32, i32
  }
}

</mosaic_0001>

<llo_original>
// kernel: vanilla_lstm_forward.1
$region0: #{vanilla_lstm_forward.1}
  #allocation0 [shape = 'u32[]', space=smem, size = 0x4, offset = 0x4, fixed_abs, tag = 'smem constant byte address 0x4 - core index']
  #allocation1 [shape = 'u32[72,128]{1,0:T(1,128)}', space=vmem, size = 0x9000, scoped, tag = 'internal scratch']
  #allocation2 [shape = 'f32[32,128]{1,0:T(8,128)}', space=vmem, size = 0x4000, scoped, tag = 'scratch operand']
  #allocation3 [shape = 'f32[2,32]{1,0:T(2,128)}', space=vmem, size = 0x400, scoped, tag = 'scratch operand']
  #allocation4 [shape = 'f32[2,32]{1,0:T(2,128)}', space=vmem, size = 0x400, scoped, tag = 'scratch operand']
  #allocation10 [shape = 's32[]', space=sflag, size = 0x4, offset = 0, fixed_abs, tag = 'sflag constant byte address 0x0 - dummy sync flag']
  %s0 = inlined_call_operand.vmem [shape: f32[8,2,128], index: 0, kind: input, shape index: {}]
  %s1 = inlined_call_operand.vmem [shape: f32[32,128], index: 1, kind: input, shape index: {}]
  %s2 = inlined_call_operand.vmem [shape: f32[2,2,128], index: 2, kind: output, shape index: {0}]
  %s3 = inlined_call_operand.hbm [shape: f32[2,32], index: 3, kind: output, shape index: {1}]
  %s4 = inlined_call_operand.hbm [shape: f32[2,32], index: 4, kind: output, shape index: {2}]
  %5 = xla_tuple %s2, %s3, %s4
  %s6 = sld [smem:[#allocation0]]
  $region58: #{vanilla_lstm_forward.1} parent=0
    _
  %s8 = ssub.s32 1, %s6
  %s9 = scalar_select 0, %s8, %s6
  $region1: #{vanilla_lstm_forward.1} parent=0
    #allocation5 [shape = 'u8[1024]{0}', space=vmem, size = 0x400, scoped, tag = 'output window, operand 1, single buffered']
    #allocation6 [shape = 's32[1]{0}', space=sflag, size = 0x4, scoped, tag = 'scoped memory for vanilla_lstm_forward.1']
    #allocation7 [shape = 'u8[1024]{0}', space=vmem, size = 0x400, scoped, tag = 'output window, operand 2, single buffered']
    #allocation8 [shape = 's32[1]{0}', space=sflag, size = 0x4, scoped, tag = 'scoped memory for vanilla_lstm_forward.1']
    %10 = vsyncpa [#allocation6], 0
    %11 = vsyncpa [#allocation8], 0
    // Predicated region
    $region2: #{vanilla_lstm_forward.1} parent=1 // pred_check
      _
    $region3: #{vanilla_lstm_forward.1} parent=1 // pred_check_branch
      %13 = sbr.rel (0) target = $region5
    $region4: #{vanilla_lstm_forward.1} parent=1 // pred_region
      _
    $region5: #{vanilla_lstm_forward.1} parent=1 // pred_fallthru
      _
    %p14 = scmp.eq.s32.totalorder 0, 0
    // Predicated region
    $region6: #{vanilla_lstm_forward.1} parent=1 // pred_check
      %p15 = pneg %p14
    $region7: #{vanilla_lstm_forward.1} parent=1 // pred_check_branch
      %17 = sbr.rel (%p15) target = $region9
    $region8: #{vanilla_lstm_forward.1} parent=1 // pred_region
      $region10: #{vanilla_lstm_forward.1} parent=8
        #allocation9 [shape = 's32[1]{0}', space=sflag, size = 0x4, scoped, tag = 'scoped memory for vanilla_lstm_forward.1']
        // Predicated region
        $region11: #{vanilla_lstm_forward.1} parent=10 // pred_check
          _
        $region12: #{vanilla_lstm_forward.1} parent=10 // pred_check_branch
          %19 = sbr.rel (0) target = $region14
        $region13: #{vanilla_lstm_forward.1} parent=10 // pred_region
          loop: start=0, step=1, limit=1
          $region15: #{vanilla_lstm_forward.1} parent=13 // loop_pre_header
            _
          $region16: #{vanilla_lstm_forward.1} parent=13 // loop_header
            %s21 = sphi 0, %s25
            %p22 = scmp.ge.s32.totalorder %s21, 1
            %s26 = sphi %s1, %s1
            %s27 = sphi [#allocation2], [#allocation2]
          $region17: #{vanilla_lstm_forward.1} parent=13 // loop_header_branch
            %24 = sbr.rel (%p22) target = $region21
          $region18: #{vanilla_lstm_forward.1} parent=13 // loop_body
            %v28 = vld [vmem:[%s26] sm:$0xff]
            %29 = vst [vmem:[%s27] sm:$0xff] %v28
            %v30 = vld [vmem:[%s26 + $0x8] sm:$0xff]
            %31 = vst [vmem:[%s27 + $0x8] sm:$0xff] %v30
            %v32 = vld [vmem:[%s26 + $0x10] sm:$0xff]
            %33 = vst [vmem:[%s27 + $0x10] sm:$0xff] %v32
            %v34 = vld [vmem:[%s26 + $0x18] sm:$0xff]
            %35 = vst [vmem:[%s27 + $0x18] sm:$0xff] %v34
          $region19: #{vanilla_lstm_forward.1} parent=13 // loop_footer
            %s25 = sadd.s32 1, %s21
          $region20: #{vanilla_lstm_forward.1} parent=13 // loop_footer_branch
            %20 = sbr.rel target = $region16
          $region21: #{vanilla_lstm_forward.1} parent=13 // loop_exit
            _
        $region14: #{vanilla_lstm_forward.1} parent=10 // pred_fallthru
          _
        // Predicated region
        $region22: #{vanilla_lstm_forward.1} parent=10 // pred_check
          _
        $region23: #{vanilla_lstm_forward.1} parent=10 // pred_check_branch
          %37 = sbr.rel target = $region25
        $region24: #{vanilla_lstm_forward.1} parent=10 // pred_region
          _
        $region25: #{vanilla_lstm_forward.1} parent=10 // pred_fallthru
          _
        // Predicated region
        $region26: #{vanilla_lstm_forward.1} parent=10 // pred_check
          _
        $region27: #{vanilla_lstm_forward.1} parent=10 // pred_check_branch
          %40 = sbr.rel (0) target = $region29
        $region28: #{vanilla_lstm_forward.1} parent=10 // pred_region
          %41 = vsyncadd [#allocation9], 512
        $region29: #{vanilla_lstm_forward.1} parent=10 // pred_fallthru
          _
        %s42 = smul.u32 32, 1
        %s43 = sshll.u32 %s42, 4
        %44 = dma.done [#allocation9], %s43
      %vm45 = vcmask 254976
      %46 = vst.msk [vmem:[#allocation3] sm:$0x3] %vm45, 0.0
      %47 = vst.msk [vmem:[#allocation4] sm:$0x3] %vm45, 0.0
    $region9: #{vanilla_lstm_forward.1} parent=1 // pred_fallthru
      _
    %v48 = vld [vmem:[#allocation2] sm:$0xff]
    %v49 = vld [vmem:[#allocation2 + $0x8] sm:$0xff]
    %v50 = vld [vmem:[#allocation2 + $0x10] sm:$0xff]
    %v51 = vld [vmem:[#allocation2 + $0x18] sm:$0xff]
    %v52 = vld [vmem:[#allocation3] sm:$0x3]
    %v53 = vld [vmem:[#allocation4] sm:$0x3]
    %v54 = vld [vmem:[%s0] sm:$0x3]
    %vm55 = vcmask 261120
    %v57 = vsel %vm55, %v52, 0
    %59 = vmatpush.msra.mxu0 0.0
    %60 = vmatpush.msra.mxu0 0.0
    %61 = vmatpush.msra.mxu0 0.0
    %62 = vmatpush.msra.mxu0 0.0
    %63 = vmatpush.msra.mxu0 0.0
    %64 = vmatpush.msra.mxu0 0.0
    %65 = vmatpush.msra.mxu0 0.0
    %66 = vmatpush.msra.mxu0 0.0
    %67 = vmatpush.msra.mxu0 0.0
    %68 = vmatpush.msra.mxu0 0.0
    %69 = vmatpush.msra.mxu0 0.0
    %70 = vmatpush.msra.mxu0 0.0
    %v71 = vand.u32 %v51, 4294901760
    %72 = vmatpush.msra.mxu0 %v71
    %v73 = vand.u32 %v50, 4294901760
    %74 = vmatpush.msra.mxu0 %v73
    %v75 = vand.u32 %v49, 4294901760
    %76 = vmatpush.msra.mxu0 %v75
    %v77 = vand.u32 %v48, 4294901760
    %78 = vmatpush.msra.mxu0 %v77
    %v79 = vand.u32 %v57, 4294901760
    %v80 = vsub.f32 %v57, %v79
    %v81 = vand.u32 %v80, 4294901760
    %v82 = vsub.f32 %v80, %v81
    %v83 = vand.u32 %v82, 4294901760
    %84 = vmatmul.f32.gmra.mxu0 %v83
    %v85 = vpop.f32.mrf.mxu0
    %v86 = vadd.f32 0.0, %v85
    %87 = vdwg.mxu0
    %88 = vmatpush.msra.mxu0 0.0
    %89 = vmatpush.msra.mxu0 0.0
    %90 = vmatpush.msra.mxu0 0.0
    %91 = vmatpush.msra.mxu0 0.0
    %92 = vmatpush.msra.mxu0 0.0
    %93 = vmatpush.msra.mxu0 0.0
    %94 = vmatpush.msra.mxu0 0.0
    %95 = vmatpush.msra.mxu0 0.0
    %96 = vmatpush.msra.mxu0 0.0
    %97 = vmatpush.msra.mxu0 0.0
    %98 = vmatpush.msra.mxu0 0.0
    %99 = vmatpush.msra.mxu0 0.0
    %v100 = vand.u32 %v51, 4294901760
    %v101 = vsub.f32 %v51, %v100
    %v102 = vand.u32 %v101, 4294901760
    %v103 = vsub.f32 %v101, %v102
    %v104 = vand.u32 %v103, 4294901760
    %105 = vmatpush.msra.mxu0 %v104
    %v106 = vand.u32 %v50, 4294901760
    %v107 = vsub.f32 %v50, %v106
    %v108 = vand.u32 %v107, 4294901760
    %v109 = vsub.f32 %v107, %v108
    %v110 = vand.u32 %v109, 4294901760
    %111 = vmatpush.msra.mxu0 %v110
    %v112 = vand.u32 %v49, 4294901760
    %v113 = vsub.f32 %v49, %v112
    %v114 = vand.u32 %v113, 4294901760
    %v115 = vsub.f32 %v113, %v114
    %v116 = vand.u32 %v115, 4294901760
    %117 = vmatpush.msra.mxu0 %v116
    %v118 = vand.u32 %v48, 4294901760
    %v119 = vsub.f32 %v48, %v118
    %v120 = vand.u32 %v119, 4294901760
    %v121 = vsub.f32 %v119, %v120
    %v122 = vand.u32 %v121, 4294901760
    %123 = vmatpush.msra.mxu0 %v122
    %v124 = vand.u32 %v57, 4294901760
    %125 = vmatmul.f32.gmra.mxu0 %v124
    %v126 = vpop.f32.mrf.mxu0
    %v127 = vadd.f32 %v86, %v126
    %128 = vdwg.mxu0
    %129 = vmatpush.msra.mxu0 0.0
    %130 = vmatpush.msra.mxu0 0.0
    %131 = vmatpush.msra.mxu0 0.0
    %132 = vmatpush.msra.mxu0 0.0
    %133 = vmatpush.msra.mxu0 0.0
    %134 = vmatpush.msra.mxu0 0.0
    %135 = vmatpush.msra.mxu0 0.0
    %136 = vmatpush.msra.mxu0 0.0
    %137 = vmatpush.msra.mxu0 0.0
    %138 = vmatpush.msra.mxu0 0.0
    %139 = vmatpush.msra.mxu0 0.0
    %140 = vmatpush.msra.mxu0 0.0
    %v141 = vand.u32 %v51, 4294901760
    %v142 = vsub.f32 %v51, %v141
    %143 = vmatpush.msra.mxu0 %v142
    %v144 = vand.u32 %v50, 4294901760
    %v145 = vsub.f32 %v50, %v144
    %146 = vmatpush.msra.mxu0 %v145
    %v147 = vand.u32 %v49, 4294901760
    %v148 = vsub.f32 %v49, %v147
    %149 = vmatpush.msra.mxu0 %v148
    %v150 = vand.u32 %v48, 4294901760
    %v151 = vsub.f32 %v48, %v150
    %152 = vmatpush.msra.mxu0 %v151
    %v153 = vand.u32 %v57, 4294901760
    %v154 = vsub.f32 %v57, %v153
    %155 = vmatmul.f32.gmra.mxu0 %v154
    %v156 = vpop.f32.mrf.mxu0
    %v157 = vadd.f32 %v127, %v156
    %158 = vdwg.mxu0
    %159 = vmatpush.msra.mxu0 0.0
    %160 = vmatpush.msra.mxu0 0.0
    %161 = vmatpush.msra.mxu0 0.0
    %162 = vmatpush.msra.mxu0 0.0
    %163 = vmatpush.msra.mxu0 0.0
    %164 = vmatpush.msra.mxu0 0.0
    %165 = vmatpush.msra.mxu0 0.0
    %166 = vmatpush.msra.mxu0 0.0
    %167 = vmatpush.msra.mxu0 0.0
    %168 = vmatpush.msra.mxu0 0.0
    %169 = vmatpush.msra.mxu0 0.0
    %170 = vmatpush.msra.mxu0 0.0
    %v171 = vand.u32 %v51, 4294901760
    %172 = vmatpush.msra.mxu0 %v171
    %v173 = vand.u32 %v50, 4294901760
    %174 = vmatpush.msra.mxu0 %v173
    %v175 = vand.u32 %v49, 4294901760
    %176 = vmatpush.msra.mxu0 %v175
    %v177 = vand.u32 %v48, 4294901760
    %178 = vmatpush.msra.mxu0 %v177
    %v179 = vand.u32 %v57, 4294901760
    %v180 = vsub.f32 %v57, %v179
    %v181 = vand.u32 %v180, 4294901760
    %182 = vmatmul.f32.gmra.mxu0 %v181
    %v183 = vpop.f32.mrf.mxu0
    %v184 = vadd.f32 %v157, %v183
    %185 = vdwg.mxu0
    %186 = vmatpush.msra.mxu0 0.0
    %187 = vmatpush.msra.mxu0 0.0
    %188 = vmatpush.msra.mxu0 0.0
    %189 = vmatpush.msra.mxu0 0.0
    %190 = vmatpush.msra.mxu0 0.0
    %191 = vmatpush.msra.mxu0 0.0
    %192 = vmatpush.msra.mxu0 0.0
    %193 = vmatpush.msra.mxu0 0.0
    %194 = vmatpush.msra.mxu0 0.0
    %195 = vmatpush.msra.mxu0 0.0
    %196 = vmatpush.msra.mxu0 0.0
    %197 = vmatpush.msra.mxu0 0.0
    %v198 = vand.u32 %v51, 4294901760
    %v199 = vsub.f32 %v51, %v198
    %v200 = vand.u32 %v199, 4294901760
    %201 = vmatpush.msra.mxu0 %v200
    %v202 = vand.u32 %v50, 4294901760
    %v203 = vsub.f32 %v50, %v202
    %v204 = vand.u32 %v203, 4294901760
    %205 = vmatpush.msra.mxu0 %v204
    %v206 = vand.u32 %v49, 4294901760
    %v207 = vsub.f32 %v49, %v206
    %v208 = vand.u32 %v207, 4294901760
    %209 = vmatpush.msra.mxu0 %v208
    %v210 = vand.u32 %v48, 4294901760
    %v211 = vsub.f32 %v48, %v210
    %v212 = vand.u32 %v211, 4294901760
    %213 = vmatpush.msra.mxu0 %v212
    %v214 = vand.u32 %v57, 4294901760
    %215 = vmatmul.f32.gmra.mxu0 %v214
    %v216 = vpop.f32.mrf.mxu0
    %v217 = vadd.f32 %v184, %v216
    %218 = vdwg.mxu0
    %219 = vmatpush.msra.mxu0 0.0
    %220 = vmatpush.msra.mxu0 0.0
    %221 = vmatpush.msra.mxu0 0.0
    %222 = vmatpush.msra.mxu0 0.0
    %223 = vmatpush.msra.mxu0 0.0
    %224 = vmatpush.msra.mxu0 0.0
    %225 = vmatpush.msra.mxu0 0.0
    %226 = vmatpush.msra.mxu0 0.0
    %227 = vmatpush.msra.mxu0 0.0
    %228 = vmatpush.msra.mxu0 0.0
    %229 = vmatpush.msra.mxu0 0.0
    %230 = vmatpush.msra.mxu0 0.0
    %v231 = vand.u32 %v51, 4294901760
    %232 = vmatpush.msra.mxu0 %v231
    %v233 = vand.u32 %v50, 4294901760
    %234 = vmatpush.msra.mxu0 %v233
    %v235 = vand.u32 %v49, 4294901760
    %236 = vmatpush.msra.mxu0 %v235
    %v237 = vand.u32 %v48, 4294901760
    %238 = vmatpush.msra.mxu0 %v237
    %v239 = vand.u32 %v57, 4294901760
    %240 = vmatmul.f32.gmra.mxu0 %v239
    %v241 = vpop.f32.mrf.mxu0
    %v242 = vadd.f32 %v217, %v241
    %243 = vdwg.mxu0
    %v244 = vadd.f32 %v54, %v242
    %v245 = vxor.u32 %v244, 2147483648
    %v246 = vmul.f32 %v245, 1.442695
    %v247 = vpow.pop %v246
    %v248 = vadd.f32 %v247, 1.0
    %v249 = vrcp.pop %v248
    %v250 = vmul.f32 %v248, %v249
    %v251 = vsub.f32 1.0, %v250
    %v252 = vmul.f32 %v249, %v251
    %v253 = vadd.f32 %v249, %v252
    %vm254 = vweird.f32 %v248
    %vm255 = vweird.f32 %v249
    %vm256 = vmor %vm254, %vm255
    %v257 = vsel %vm256, %v249, %v253
    %v258 = vand.u32 2147483647, %v248
    %vm259 = vcmp.eq.f32.partialorder %v258, 8.507059e+37
    %v260 = vand.u32 %v248, 2147483648
    %v261 = vor.u32 1.1754944e-38, %v260
    %v262 = vsel %vm259, %v261, %v257
    %v263 = vmul.f32 1.0, %v262
    %v264 = vtanh.pop %v244
    %266 = vrot.lane.b32.xlu0 %v53, 32
    %v267 = vpop.permute.xlu0 %266
    %v269 = vmul.f32 %v263, %v267
    %271 = vrot.lane.b32.xlu0 %v264, 32
    %v272 = vpop.permute.xlu0 %271
    %v274 = vmul.f32 %v263, %v272
    %276 = vrot.lane.b32.xlu0 %v274, 32
    %v277 = vpop.permute.xlu0 %276
    %v279 = vadd.f32 %v269, %v277
    %v280 = vtanh.pop %v279
    %282 = vrot.lane.b32.xlu0 %v280, 32
    %v283 = vpop.permute.xlu0 %282
    %v285 = vmul.f32 %v263, %v283
    %s286 = scalar_lea.vmem %s0, 2
    %v287 = vld [vmem:[%s286] sm:$0x3]
    %289 = vrot.lane.b32.xlu0 %v285, 64
    %v290 = vpop.permute.xlu0 %289
    %v291 = vsel %vm55, %v290, 0
    %293 = vmatpush.msra.mxu0 0.0
    %294 = vmatpush.msra.mxu0 0.0
    %295 = vmatpush.msra.mxu0 0.0
    %296 = vmatpush.msra.mxu0 0.0
    %297 = vmatpush.msra.mxu0 0.0
    %298 = vmatpush.msra.mxu0 0.0
    %299 = vmatpush.msra.mxu0 0.0
    %300 = vmatpush.msra.mxu0 0.0
    %301 = vmatpush.msra.mxu0 0.0
    %302 = vmatpush.msra.mxu0 0.0
    %303 = vmatpush.msra.mxu0 0.0
    %304 = vmatpush.msra.mxu0 0.0
    %v305 = vand.u32 %v51, 4294901760
    %306 = vmatpush.msra.mxu0 %v305
    %v307 = vand.u32 %v50, 4294901760
    %308 = vmatpush.msra.mxu0 %v307
    %v309 = vand.u32 %v49, 4294901760
    %310 = vmatpush.msra.mxu0 %v309
    %v311 = vand.u32 %v48, 4294901760
    %312 = vmatpush.msra.mxu0 %v311
    %v313 = vand.u32 %v291, 4294901760
    %v314 = vsub.f32 %v291, %v313
    %v315 = vand.u32 %v314, 4294901760
    %v316 = vsub.f32 %v314, %v315
    %v317 = vand.u32 %v316, 4294901760
    %318 = vmatmul.f32.gmra.mxu0 %v317
    %v319 = vpop.f32.mrf.mxu0
    %v320 = vadd.f32 0.0, %v319
    %321 = vdwg.mxu0
    %322 = vmatpush.msra.mxu0 0.0
    %323 = vmatpush.msra.mxu0 0.0
    %324 = vmatpush.msra.mxu0 0.0
    %325 = vmatpush.msra.mxu0 0.0
    %326 = vmatpush.msra.mxu0 0.0
    %327 = vmatpush.msra.mxu0 0.0
    %328 = vmatpush.msra.mxu0 0.0
    %329 = vmatpush.msra.mxu0 0.0
    %330 = vmatpush.msra.mxu0 0.0
    %331 = vmatpush.msra.mxu0 0.0
    %332 = vmatpush.msra.mxu0 0.0
    %333 = vmatpush.msra.mxu0 0.0
    %v334 = vand.u32 %v51, 4294901760
    %v335 = vsub.f32 %v51, %v334
    %v336 = vand.u32 %v335, 4294901760
    %v337 = vsub.f32 %v335, %v336
    %v338 = vand.u32 %v337, 4294901760
    %339 = vmatpush.msra.mxu0 %v338
    %v340 = vand.u32 %v50, 4294901760
    %v341 = vsub.f32 %v50, %v340
    %v342 = vand.u32 %v341, 4294901760
    %v343 = vsub.f32 %v341, %v342
    %v344 = vand.u32 %v343, 4294901760
    %345 = vmatpush.msra.mxu0 %v344
    %v346 = vand.u32 %v49, 4294901760
    %v347 = vsub.f32 %v49, %v346
    %v348 = vand.u32 %v347, 4294901760
    %v349 = vsub.f32 %v347, %v348
    %v350 = vand.u32 %v349, 4294901760
    %351 = vmatpush.msra.mxu0 %v350
    %v352 = vand.u32 %v48, 4294901760
    %v353 = vsub.f32 %v48, %v352
    %v354 = vand.u32 %v353, 4294901760
    %v355 = vsub.f32 %v353, %v354
    %v356 = vand.u32 %v355, 4294901760
    %357 = vmatpush.msra.mxu0 %v356
    %v358 = vand.u32 %v291, 4294901760
    %359 = vmatmul.f32.gmra.mxu0 %v358
    %v360 = vpop.f32.mrf.mxu0
    %v361 = vadd.f32 %v320, %v360
    %362 = vdwg.mxu0
    %363 = vmatpush.msra.mxu0 0.0
    %364 = vmatpush.msra.mxu0 0.0
    %365 = vmatpush.msra.mxu0 0.0
    %366 = vmatpush.msra.mxu0 0.0
    %367 = vmatpush.msra.mxu0 0.0
    %368 = vmatpush.msra.mxu0 0.0
    %369 = vmatpush.msra.mxu0 0.0
    %370 = vmatpush.msra.mxu0 0.0
    %371 = vmatpush.msra.mxu0 0.0
    %372 = vmatpush.msra.mxu0 0.0
    %373 = vmatpush.msra.mxu0 0.0
    %374 = vmatpush.msra.mxu0 0.0
    %v375 = vand.u32 %v51, 4294901760
    %v376 = vsub.f32 %v51, %v375
    %377 = vmatpush.msra.mxu0 %v376
    %v378 = vand.u32 %v50, 4294901760
    %v379 = vsub.f32 %v50, %v378
    %380 = vmatpush.msra.mxu0 %v379
    %v381 = vand.u32 %v49, 4294901760
    %v382 = vsub.f32 %v49, %v381
    %383 = vmatpush.msra.mxu0 %v382
    %v384 = vand.u32 %v48, 4294901760
    %v385 = vsub.f32 %v48, %v384
    %386 = vmatpush.msra.mxu0 %v385
    %v387 = vand.u32 %v291, 4294901760
    %v388 = vsub.f32 %v291, %v387
    %389 = vmatmul.f32.gmra.mxu0 %v388
    %v390 = vpop.f32.mrf.mxu0
    %v391 = vadd.f32 %v361, %v390
    %392 = vdwg.mxu0
    %393 = vmatpush.msra.mxu0 0.0
    %394 = vmatpush.msra.mxu0 0.0
    %395 = vmatpush.msra.mxu0 0.0
    %396 = vmatpush.msra.mxu0 0.0
    %397 = vmatpush.msra.mxu0 0.0
    %398 = vmatpush.msra.mxu0 0.0
    %399 = vmatpush.msra.mxu0 0.0
    %400 = vmatpush.msra.mxu0 0.0
    %401 = vmatpush.msra.mxu0 0.0
    %402 = vmatpush.msra.mxu0 0.0
    %403 = vmatpush.msra.mxu0 0.0
    %404 = vmatpush.msra.mxu0 0.0
    %v405 = vand.u32 %v51, 4294901760
    %406 = vmatpush.msra.mxu0 %v405
    %v407 = vand.u32 %v50, 4294901760
    %408 = vmatpush.msra.mxu0 %v407
    %v409 = vand.u32 %v49, 4294901760
    %410 = vmatpush.msra.mxu0 %v409
    %v411 = vand.u32 %v48, 4294901760
    %412 = vmatpush.msra.mxu0 %v411
    %v413 = vand.u32 %v291, 4294901760
    %v414 = vsub.f32 %v291, %v413
    %v415 = vand.u32 %v414, 4294901760
    %416 = vmatmul.f32.gmra.mxu0 %v415
    %v417 = vpop.f32.mrf.mxu0
    %v418 = vadd.f32 %v391, %v417
    %419 = vdwg.mxu0
    %420 = vmatpush.msra.mxu0 0.0
    %421 = vmatpush.msra.mxu0 0.0
    %422 = vmatpush.msra.mxu0 0.0
    %423 = vmatpush.msra.mxu0 0.0
    %424 = vmatpush.msra.mxu0 0.0
    %425 = vmatpush.msra.mxu0 0.0
    %426 = vmatpush.msra.mxu0 0.0
    %427 = vmatpush.msra.mxu0 0.0
    %428 = vmatpush.msra.mxu0 0.0
    %429 = vmatpush.msra.mxu0 0.0
    %430 = vmatpush.msra.mxu0 0.0
    %431 = vmatpush.msra.mxu0 0.0
    %v432 = vand.u32 %v51, 4294901760
    %v433 = vsub.f32 %v51, %v432
    %v434 = vand.u32 %v433, 4294901760
    %435 = vmatpush.msra.mxu0 %v434
    %v436 = vand.u32 %v50, 4294901760
    %v437 = vsub.f32 %v50, %v436
    %v438 = vand.u32 %v437, 4294901760
    %439 = vmatpush.msra.mxu0 %v438
    %v440 = vand.u32 %v49, 4294901760
    %v441 = vsub.f32 %v49, %v440
    %v442 = vand.u32 %v441, 4294901760
    %443 = vmatpush.msra.mxu0 %v442
    %v444 = vand.u32 %v48, 4294901760
    %v445 = vsub.f32 %v48, %v444
    %v446 = vand.u32 %v445, 4294901760
    %447 = vmatpush.msra.mxu0 %v446
    %v448 = vand.u32 %v291, 4294901760
    %449 = vmatmul.f32.gmra.mxu0 %v448
    %v450 = vpop.f32.mrf.mxu0
    %v451 = vadd.f32 %v418, %v450
    %452 = vdwg.mxu0
    %453 = vmatpush.msra.mxu0 0.0
    %454 = vmatpush.msra.mxu0 0.0
    %455 = vmatpush.msra.mxu0 0.0
    %456 = vmatpush.msra.mxu0 0.0
    %457 = vmatpush.msra.mxu0 0.0
    %458 = vmatpush.msra.mxu0 0.0
    %459 = vmatpush.msra.mxu0 0.0
    %460 = vmatpush.msra.mxu0 0.0
    %461 = vmatpush.msra.mxu0 0.0
    %462 = vmatpush.msra.mxu0 0.0
    %463 = vmatpush.msra.mxu0 0.0
    %464 = vmatpush.msra.mxu0 0.0
    %v465 = vand.u32 %v51, 4294901760
    %466 = vmatpush.msra.mxu0 %v465
    %v467 = vand.u32 %v50, 4294901760
    %468 = vmatpush.msra.mxu0 %v467
    %v469 = vand.u32 %v49, 4294901760
    %470 = vmatpush.msra.mxu0 %v469
    %v471 = vand.u32 %v48, 4294901760
    %472 = vmatpush.msra.mxu0 %v471
    %v473 = vand.u32 %v291, 4294901760
    %474 = vmatmul.f32.gmra.mxu0 %v473
    %v475 = vpop.f32.mrf.mxu0
    %v476 = vadd.f32 %v451, %v475
    %477 = vdwg.mxu0
    %v478 = vadd.f32 %v287, %v476
    %v479 = vxor.u32 %v478, 2147483648
    %v480 = vmul.f32 %v479, 1.442695
    %v481 = vpow.pop %v480
    %v482 = vadd.f32 %v481, 1.0
    %v483 = vrcp.pop %v482
    %v484 = vmul.f32 %v482, %v483
    %v485 = vsub.f32 1.0, %v484
    %v486 = vmul.f32 %v483, %v485
    %v487 = vadd.f32 %v483, %v486
    %vm488 = vweird.f32 %v482
    %vm489 = vweird.f32 %v483
    %vm490 = vmor %vm488, %vm489
    %v491 = vsel %vm490, %v483, %v487
    %v492 = vand.u32 2147483647, %v482
    %vm493 = vcmp.eq.f32.partialorder %v492, 8.507059e+37
    %v494 = vand.u32 %v482, 2147483648
    %v495 = vor.u32 1.1754944e-38, %v494
    %v496 = vsel %vm493, %v495, %v491
    %v497 = vmul.f32 1.0, %v496
    %v498 = vtanh.pop %v478
    %v499 = vmul.f32 %v497, %v279
    %501 = vrot.lane.b32.xlu0 %v498, 32
    %v502 = vpop.permute.xlu0 %501
    %v504 = vmul.f32 %v497, %v502
    %506 = vrot.lane.b32.xlu0 %v504, 32
    %v507 = vpop.permute.xlu0 %506
    %v509 = vadd.f32 %v499, %v507
    %v510 = vtanh.pop %v509
    %512 = vrot.lane.b32.xlu0 %v510, 32
    %v513 = vpop.permute.xlu0 %512
    %v515 = vmul.f32 %v497, %v513
    %s516 = scalar_lea.vmem %s0, 4
    %v517 = vld [vmem:[%s516] sm:$0x3]
    %519 = vrot.lane.b32.xlu0 %v515, 64
    %v520 = vpop.permute.xlu0 %519
    %v521 = vsel %vm55, %v520, 0
    %523 = vmatpush.msra.mxu0 0.0
    %524 = vmatpush.msra.mxu0 0.0
    %525 = vmatpush.msra.mxu0 0.0
    %526 = vmatpush.msra.mxu0 0.0
    %527 = vmatpush.msra.mxu0 0.0
    %528 = vmatpush.msra.mxu0 0.0
    %529 = vmatpush.msra.mxu0 0.0
    %530 = vmatpush.msra.mxu0 0.0
    %531 = vmatpush.msra.mxu0 0.0
    %532 = vmatpush.msra.mxu0 0.0
    %533 = vmatpush.msra.mxu0 0.0
    %534 = vmatpush.msra.mxu0 0.0
    %v535 = vand.u32 %v51, 4294901760
    %536 = vmatpush.msra.mxu0 %v535
    %v537 = vand.u32 %v50, 4294901760
    %538 = vmatpush.msra.mxu0 %v537
    %v539 = vand.u32 %v49, 4294901760
    %540 = vmatpush.msra.mxu0 %v539
    %v541 = vand.u32 %v48, 4294901760
    %542 = vmatpush.msra.mxu0 %v541
    %v543 = vand.u32 %v521, 4294901760
    %v544 = vsub.f32 %v521, %v543
    %v545 = vand.u32 %v544, 4294901760
    %v546 = vsub.f32 %v544, %v545
    %v547 = vand.u32 %v546, 4294901760
    %548 = vmatmul.f32.gmra.mxu0 %v547
    %v549 = vpop.f32.mrf.mxu0
    %v550 = vadd.f32 0.0, %v549
    %551 = vdwg.mxu0
    %552 = vmatpush.msra.mxu0 0.0
    %553 = vmatpush.msra.mxu0 0.0
    %554 = vmatpush.msra.mxu0 0.0
    %555 = vmatpush.msra.mxu0 0.0
    %556 = vmatpush.msra.mxu0 0.0
    %557 = vmatpush.msra.mxu0 0.0
    %558 = vmatpush.msra.mxu0 0.0
    %559 = vmatpush.msra.mxu0 0.0
    %560 = vmatpush.msra.mxu0 0.0
    %561 = vmatpush.msra.mxu0 0.0
    %562 = vmatpush.msra.mxu0 0.0
    %563 = vmatpush.msra.mxu0 0.0
    %v564 = vand.u32 %v51, 4294901760
    %v565 = vsub.f32 %v51, %v564
    %v566 = vand.u32 %v565, 4294901760
    %v567 = vsub.f32 %v565, %v566
    %v568 = vand.u32 %v567, 4294901760
    %569 = vmatpush.msra.mxu0 %v568
    %v570 = vand.u32 %v50, 4294901760
    %v571 = vsub.f32 %v50, %v570
    %v572 = vand.u32 %v571, 4294901760
    %v573 = vsub.f32 %v571, %v572
    %v574 = vand.u32 %v573, 4294901760
    %575 = vmatpush.msra.mxu0 %v574
    %v576 = vand.u32 %v49, 4294901760
    %v577 = vsub.f32 %v49, %v576
    %v578 = vand.u32 %v577, 4294901760
    %v579 = vsub.f32 %v577, %v578
    %v580 = vand.u32 %v579, 4294901760
    %581 = vmatpush.msra.mxu0 %v580
    %v582 = vand.u32 %v48, 4294901760
    %v583 = vsub.f32 %v48, %v582
    %v584 = vand.u32 %v583, 4294901760
    %v585 = vsub.f32 %v583, %v584
    %v586 = vand.u32 %v585, 4294901760
    %587 = vmatpush.msra.mxu0 %v586
    %v588 = vand.u32 %v521, 4294901760
    %589 = vmatmul.f32.gmra.mxu0 %v588
    %v590 = vpop.f32.mrf.mxu0
    %v591 = vadd.f32 %v550, %v590
    %592 = vdwg.mxu0
    %593 = vmatpush.msra.mxu0 0.0
    %594 = vmatpush.msra.mxu0 0.0
    %595 = vmatpush.msra.mxu0 0.0
    %596 = vmatpush.msra.mxu0 0.0
    %597 = vmatpush.msra.mxu0 0.0
    %598 = vmatpush.msra.mxu0 0.0
    %599 = vmatpush.msra.mxu0 0.0
    %600 = vmatpush.msra.mxu0 0.0
    %601 = vmatpush.msra.mxu0 0.0
    %602 = vmatpush.msra.mxu0 0.0
    %603 = vmatpush.msra.mxu0 0.0
    %604 = vmatpush.msra.mxu0 0.0
    %v605 = vand.u32 %v51, 4294901760
    %v606 = vsub.f32 %v51, %v605
    %607 = vmatpush.msra.mxu0 %v606
    %v608 = vand.u32 %v50, 4294901760
    %v609 = vsub.f32 %v50, %v608
    %610 = vmatpush.msra.mxu0 %v609
    %v611 = vand.u32 %v49, 4294901760
    %v612 = vsub.f32 %v49, %v611
    %613 = vmatpush.msra.mxu0 %v612
    %v614 = vand.u32 %v48, 4294901760
    %v615 = vsub.f32 %v48, %v614
    %616 = vmatpush.msra.mxu0 %v615
    %v617 = vand.u32 %v521, 4294901760
    %v618 = vsub.f32 %v521, %v617
    %619 = vmatmul.f32.gmra.mxu0 %v618
    %v620 = vpop.f32.mrf.mxu0
    %v621 = vadd.f32 %v591, %v620
    %622 = vdwg.mxu0
    %623 = vmatpush.msra.mxu0 0.0
    %624 = vmatpush.msra.mxu0 0.0
    %625 = vmatpush.msra.mxu0 0.0
    %626 = vmatpush.msra.mxu0 0.0
    %627 = vmatpush.msra.mxu0 0.0
    %628 = vmatpush.msra.mxu0 0.0
    %629 = vmatpush.msra.mxu0 0.0
    %630 = vmatpush.msra.mxu0 0.0
    %631 = vmatpush.msra.mxu0 0.0
    %632 = vmatpush.msra.mxu0 0.0
    %633 = vmatpush.msra.mxu0 0.0
    %634 = vmatpush.msra.mxu0 0.0
    %v635 = vand.u32 %v51, 4294901760
    %636 = vmatpush.msra.mxu0 %v635
    %v637 = vand.u32 %v50, 4294901760
    %638 = vmatpush.msra.mxu0 %v637
    %v639 = vand.u32 %v49, 4294901760
    %640 = vmatpush.msra.mxu0 %v639
    %v641 = vand.u32 %v48, 4294901760
    %642 = vmatpush.msra.mxu0 %v641
    %v643 = vand.u32 %v521, 4294901760
    %v644 = vsub.f32 %v521, %v643
    %v645 = vand.u32 %v644, 4294901760
    %646 = vmatmul.f32.gmra.mxu0 %v645
    %v647 = vpop.f32.mrf.mxu0
    %v648 = vadd.f32 %v621, %v647
    %649 = vdwg.mxu0
    %650 = vmatpush.msra.mxu0 0.0
    %651 = vmatpush.msra.mxu0 0.0
    %652 = vmatpush.msra.mxu0 0.0
    %653 = vmatpush.msra.mxu0 0.0
    %654 = vmatpush.msra.mxu0 0.0
    %655 = vmatpush.msra.mxu0 0.0
    %656 = vmatpush.msra.mxu0 0.0
    %657 = vmatpush.msra.mxu0 0.0
    %658 = vmatpush.msra.mxu0 0.0
    %659 = vmatpush.msra.mxu0 0.0
    %660 = vmatpush.msra.mxu0 0.0
    %661 = vmatpush.msra.mxu0 0.0
    %v662 = vand.u32 %v51, 4294901760
    %v663 = vsub.f32 %v51, %v662
    %v664 = vand.u32 %v663, 4294901760
    %665 = vmatpush.msra.mxu0 %v664
    %v666 = vand.u32 %v50, 4294901760
    %v667 = vsub.f32 %v50, %v666
    %v668 = vand.u32 %v667, 4294901760
    %669 = vmatpush.msra.mxu0 %v668
    %v670 = vand.u32 %v49, 4294901760
    %v671 = vsub.f32 %v49, %v670
    %v672 = vand.u32 %v671, 4294901760
    %673 = vmatpush.msra.mxu0 %v672
    %v674 = vand.u32 %v48, 4294901760
    %v675 = vsub.f32 %v48, %v674
    %v676 = vand.u32 %v675, 4294901760
    %677 = vmatpush.msra.mxu0 %v676
    %v678 = vand.u32 %v521, 4294901760
    %679 = vmatmul.f32.gmra.mxu0 %v678
    %v680 = vpop.f32.mrf.mxu0
    %v681 = vadd.f32 %v648, %v680
    %682 = vdwg.mxu0
    %683 = vmatpush.msra.mxu0 0.0
    %684 = vmatpush.msra.mxu0 0.0
    %685 = vmatpush.msra.mxu0 0.0
    %686 = vmatpush.msra.mxu0 0.0
    %687 = vmatpush.msra.mxu0 0.0
    %688 = vmatpush.msra.mxu0 0.0
    %689 = vmatpush.msra.mxu0 0.0
    %690 = vmatpush.msra.mxu0 0.0
    %691 = vmatpush.msra.mxu0 0.0
    %692 = vmatpush.msra.mxu0 0.0
    %693 = vmatpush.msra.mxu0 0.0
    %694 = vmatpush.msra.mxu0 0.0
    %v695 = vand.u32 %v51, 4294901760
    %696 = vmatpush.msra.mxu0 %v695
    %v697 = vand.u32 %v50, 4294901760
    %698 = vmatpush.msra.mxu0 %v697
    %v699 = vand.u32 %v49, 4294901760
    %700 = vmatpush.msra.mxu0 %v699
    %v701 = vand.u32 %v48, 4294901760
    %702 = vmatpush.msra.mxu0 %v701
    %v703 = vand.u32 %v521, 4294901760
    %704 = vmatmul.f32.gmra.mxu0 %v703
    %v705 = vpop.f32.mrf.mxu0
    %v706 = vadd.f32 %v681, %v705
    %707 = vdwg.mxu0
    %v708 = vadd.f32 %v517, %v706
    %v709 = vxor.u32 %v708, 2147483648
    %v710 = vmul.f32 %v709, 1.442695
    %v711 = vpow.pop %v710
    %v712 = vadd.f32 %v711, 1.0
    %v713 = vrcp.pop %v712
    %v714 = vmul.f32 %v712, %v713
    %v715 = vsub.f32 1.0, %v714
    %v716 = vmul.f32 %v713, %v715
    %v717 = vadd.f32 %v713, %v716
    %vm718 = vweird.f32 %v712
    %vm719 = vweird.f32 %v713
    %vm720 = vmor %vm718, %vm719
    %v721 = vsel %vm720, %v713, %v717
    %v722 = vand.u32 2147483647, %v712
    %vm723 = vcmp.eq.f32.partialorder %v722, 8.507059e+37
    %v724 = vand.u32 %v712, 2147483648
    %v725 = vor.u32 1.1754944e-38, %v724
    %v726 = vsel %vm723, %v725, %v721
    %v727 = vmul.f32 1.0, %v726
    %v728 = vtanh.pop %v708
    %v729 = vmul.f32 %v727, %v509
    %731 = vrot.lane.b32.xlu0 %v728, 32
    %v732 = vpop.permute.xlu0 %731
    %v734 = vmul.f32 %v727, %v732
    %736 = vrot.lane.b32.xlu0 %v734, 32
    %v737 = vpop.permute.xlu0 %736
    %v739 = vadd.f32 %v729, %v737
    %v740 = vtanh.pop %v739
    %742 = vrot.lane.b32.xlu0 %v740, 32
    %v743 = vpop.permute.xlu0 %742
    %v745 = vmul.f32 %v727, %v743
    %s746 = scalar_lea.vmem %s0, 6
    %v747 = vld [vmem:[%s746] sm:$0x3]
    %749 = vrot.lane.b32.xlu0 %v745, 64
    %v750 = vpop.permute.xlu0 %749
    %v751 = vsel %vm55, %v750, 0
    %753 = vmatpush.msra.mxu0 0.0
    %754 = vmatpush.msra.mxu0 0.0
    %755 = vmatpush.msra.mxu0 0.0
    %756 = vmatpush.msra.mxu0 0.0
    %757 = vmatpush.msra.mxu0 0.0
    %758 = vmatpush.msra.mxu0 0.0
    %759 = vmatpush.msra.mxu0 0.0
    %760 = vmatpush.msra.mxu0 0.0
    %761 = vmatpush.msra.mxu0 0.0
    %762 = vmatpush.msra.mxu0 0.0
    %763 = vmatpush.msra.mxu0 0.0
    %764 = vmatpush.msra.mxu0 0.0
    %v765 = vand.u32 %v51, 4294901760
    %766 = vmatpush.msra.mxu0 %v765
    %v767 = vand.u32 %v50, 4294901760
    %768 = vmatpush.msra.mxu0 %v767
    %v769 = vand.u32 %v49, 4294901760
    %770 = vmatpush.msra.mxu0 %v769
    %v771 = vand.u32 %v48, 4294901760
    %772 = vmatpush.msra.mxu0 %v771
    %v773 = vand.u32 %v751, 4294901760
    %v774 = vsub.f32 %v751, %v773
    %v775 = vand.u32 %v774, 4294901760
    %v776 = vsub.f32 %v774, %v775
    %v777 = vand.u32 %v776, 4294901760
    %778 = vmatmul.f32.gmra.mxu0 %v777
    %v779 = vpop.f32.mrf.mxu0
    %v780 = vadd.f32 0.0, %v779
    %781 = vdwg.mxu0
    %782 = vmatpush.msra.mxu0 0.0
    %783 = vmatpush.msra.mxu0 0.0
    %784 = vmatpush.msra.mxu0 0.0
    %785 = vmatpush.msra.mxu0 0.0
    %786 = vmatpush.msra.mxu0 0.0
    %787 = vmatpush.msra.mxu0 0.0
    %788 = vmatpush.msra.mxu0 0.0
    %789 = vmatpush.msra.mxu0 0.0
    %790 = vmatpush.msra.mxu0 0.0
    %791 = vmatpush.msra.mxu0 0.0
    %792 = vmatpush.msra.mxu0 0.0
    %793 = vmatpush.msra.mxu0 0.0
    %v794 = vand.u32 %v51, 4294901760
    %v795 = vsub.f32 %v51, %v794
    %v796 = vand.u32 %v795, 4294901760
    %v797 = vsub.f32 %v795, %v796
    %v798 = vand.u32 %v797, 4294901760
    %799 = vmatpush.msra.mxu0 %v798
    %v800 = vand.u32 %v50, 4294901760
    %v801 = vsub.f32 %v50, %v800
    %v802 = vand.u32 %v801, 4294901760
    %v803 = vsub.f32 %v801, %v802
    %v804 = vand.u32 %v803, 4294901760
    %805 = vmatpush.msra.mxu0 %v804
    %v806 = vand.u32 %v49, 4294901760
    %v807 = vsub.f32 %v49, %v806
    %v808 = vand.u32 %v807, 4294901760
    %v809 = vsub.f32 %v807, %v808
    %v810 = vand.u32 %v809, 4294901760
    %811 = vmatpush.msra.mxu0 %v810
    %v812 = vand.u32 %v48, 4294901760
    %v813 = vsub.f32 %v48, %v812
    %v814 = vand.u32 %v813, 4294901760
    %v815 = vsub.f32 %v813, %v814
    %v816 = vand.u32 %v815, 4294901760
    %817 = vmatpush.msra.mxu0 %v816
    %v818 = vand.u32 %v751, 4294901760
    %819 = vmatmul.f32.gmra.mxu0 %v818
    %v820 = vpop.f32.mrf.mxu0
    %v821 = vadd.f32 %v780, %v820
    %822 = vdwg.mxu0
    %823 = vmatpush.msra.mxu0 0.0
    %824 = vmatpush.msra.mxu0 0.0
    %825 = vmatpush.msra.mxu0 0.0
    %826 = vmatpush.msra.mxu0 0.0
    %827 = vmatpush.msra.mxu0 0.0
    %828 = vmatpush.msra.mxu0 0.0
    %829 = vmatpush.msra.mxu0 0.0
    %830 = vmatpush.msra.mxu0 0.0
    %831 = vmatpush.msra.mxu0 0.0
    %832 = vmatpush.msra.mxu0 0.0
    %833 = vmatpush.msra.mxu0 0.0
    %834 = vmatpush.msra.mxu0 0.0
    %v835 = vand.u32 %v51, 4294901760
    %v836 = vsub.f32 %v51, %v835
    %837 = vmatpush.msra.mxu0 %v836
    %v838 = vand.u32 %v50, 4294901760
    %v839 = vsub.f32 %v50, %v838
    %840 = vmatpush.msra.mxu0 %v839
    %v841 = vand.u32 %v49, 4294901760
    %v842 = vsub.f32 %v49, %v841
    %843 = vmatpush.msra.mxu0 %v842
    %v844 = vand.u32 %v48, 4294901760
    %v845 = vsub.f32 %v48, %v844
    %846 = vmatpush.msra.mxu0 %v845
    %v847 = vand.u32 %v751, 4294901760
    %v848 = vsub.f32 %v751, %v847
    %849 = vmatmul.f32.gmra.mxu0 %v848
    %v850 = vpop.f32.mrf.mxu0
    %v851 = vadd.f32 %v821, %v850
    %852 = vdwg.mxu0
    %853 = vmatpush.msra.mxu0 0.0
    %854 = vmatpush.msra.mxu0 0.0
    %855 = vmatpush.msra.mxu0 0.0
    %856 = vmatpush.msra.mxu0 0.0
    %857 = vmatpush.msra.mxu0 0.0
    %858 = vmatpush.msra.mxu0 0.0
    %859 = vmatpush.msra.mxu0 0.0
    %860 = vmatpush.msra.mxu0 0.0
    %861 = vmatpush.msra.mxu0 0.0
    %862 = vmatpush.msra.mxu0 0.0
    %863 = vmatpush.msra.mxu0 0.0
    %864 = vmatpush.msra.mxu0 0.0
    %v865 = vand.u32 %v51, 4294901760
    %866 = vmatpush.msra.mxu0 %v865
    %v867 = vand.u32 %v50, 4294901760
    %868 = vmatpush.msra.mxu0 %v867
    %v869 = vand.u32 %v49, 4294901760
    %870 = vmatpush.msra.mxu0 %v869
    %v871 = vand.u32 %v48, 4294901760
    %872 = vmatpush.msra.mxu0 %v871
    %v873 = vand.u32 %v751, 4294901760
    %v874 = vsub.f32 %v751, %v873
    %v875 = vand.u32 %v874, 4294901760
    %876 = vmatmul.f32.gmra.mxu0 %v875
    %v877 = vpop.f32.mrf.mxu0
    %v878 = vadd.f32 %v851, %v877
    %879 = vdwg.mxu0
    %880 = vmatpush.msra.mxu0 0.0
    %881 = vmatpush.msra.mxu0 0.0
    %882 = vmatpush.msra.mxu0 0.0
    %883 = vmatpush.msra.mxu0 0.0
    %884 = vmatpush.msra.mxu0 0.0
    %885 = vmatpush.msra.mxu0 0.0
    %886 = vmatpush.msra.mxu0 0.0
    %887 = vmatpush.msra.mxu0 0.0
    %888 = vmatpush.msra.mxu0 0.0
    %889 = vmatpush.msra.mxu0 0.0
    %890 = vmatpush.msra.mxu0 0.0
    %891 = vmatpush.msra.mxu0 0.0
    %v892 = vand.u32 %v51, 4294901760
    %v893 = vsub.f32 %v51, %v892
    %v894 = vand.u32 %v893, 4294901760
    %895 = vmatpush.msra.mxu0 %v894
    %v896 = vand.u32 %v50, 4294901760
    %v897 = vsub.f32 %v50, %v896
    %v898 = vand.u32 %v897, 4294901760
    %899 = vmatpush.msra.mxu0 %v898
    %v900 = vand.u32 %v49, 4294901760
    %v901 = vsub.f32 %v49, %v900
    %v902 = vand.u32 %v901, 4294901760
    %903 = vmatpush.msra.mxu0 %v902
    %v904 = vand.u32 %v48, 4294901760
    %v905 = vsub.f32 %v48, %v904
    %v906 = vand.u32 %v905, 4294901760
    %907 = vmatpush.msra.mxu0 %v906
    %v908 = vand.u32 %v751, 4294901760
    %909 = vmatmul.f32.gmra.mxu0 %v908
    %v910 = vpop.f32.mrf.mxu0
    %v911 = vadd.f32 %v878, %v910
    %912 = vdwg.mxu0
    %913 = vmatpush.msra.mxu0 0.0
    %914 = vmatpush.msra.mxu0 0.0
    %915 = vmatpush.msra.mxu0 0.0
    %916 = vmatpush.msra.mxu0 0.0
    %917 = vmatpush.msra.mxu0 0.0
    %918 = vmatpush.msra.mxu0 0.0
    %919 = vmatpush.msra.mxu0 0.0
    %920 = vmatpush.msra.mxu0 0.0
    %921 = vmatpush.msra.mxu0 0.0
    %922 = vmatpush.msra.mxu0 0.0
    %923 = vmatpush.msra.mxu0 0.0
    %924 = vmatpush.msra.mxu0 0.0
    %v925 = vand.u32 %v51, 4294901760
    %926 = vmatpush.msra.mxu0 %v925
    %v927 = vand.u32 %v50, 4294901760
    %928 = vmatpush.msra.mxu0 %v927
    %v929 = vand.u32 %v49, 4294901760
    %930 = vmatpush.msra.mxu0 %v929
    %v931 = vand.u32 %v48, 4294901760
    %932 = vmatpush.msra.mxu0 %v931
    %v933 = vand.u32 %v751, 4294901760
    %934 = vmatmul.f32.gmra.mxu0 %v933
    %v935 = vpop.f32.mrf.mxu0
    %v936 = vadd.f32 %v911, %v935
    %937 = vdwg.mxu0
    %v938 = vadd.f32 %v747, %v936
    %v939 = vxor.u32 %v938, 2147483648
    %v940 = vmul.f32 %v939, 1.442695
    %v941 = vpow.pop %v940
    %v942 = vadd.f32 %v941, 1.0
    %v943 = vrcp.pop %v942
    %v944 = vmul.f32 %v942, %v943
    %v945 = vsub.f32 1.0, %v944
    %v946 = vmul.f32 %v943, %v945
    %v947 = vadd.f32 %v943, %v946
    %vm948 = vweird.f32 %v942
    %vm949 = vweird.f32 %v943
    %vm950 = vmor %vm948, %vm949
    %v951 = vsel %vm950, %v943, %v947
    %v952 = vand.u32 2147483647, %v942
    %vm953 = vcmp.eq.f32.partialorder %v952, 8.507059e+37
    %v954 = vand.u32 %v942, 2147483648
    %v955 = vor.u32 1.1754944e-38, %v954
    %v956 = vsel %vm953, %v955, %v951
    %v957 = vmul.f32 1.0, %v956
    %v958 = vtanh.pop %v938
    %v959 = vmul.f32 %v957, %v739
    %961 = vrot.lane.b32.xlu0 %v958, 32
    %v962 = vpop.permute.xlu0 %961
    %v964 = vmul.f32 %v957, %v962
    %966 = vrot.lane.b32.xlu0 %v964, 32
    %v967 = vpop.permute.xlu0 %966
    %v969 = vadd.f32 %v959, %v967
    %v970 = vtanh.pop %v969
    %972 = vrot.lane.b32.xlu0 %v970, 32
    %v973 = vpop.permute.xlu0 %972
    %v975 = vmul.f32 %v957, %v973
    %977 = vrot.lane.b32.xlu0 %v515, 96
    %v978 = vpop.permute.xlu0 %977
    %981 = vrot.lane.b32.xlu0 %v975, 32
    %v982 = vpop.permute.xlu0 %981
    %v984 = vsel %vm55, %v290, %v978
    %vm985 = vcmask 523264
    %v986 = vsel %vm985, %v984, %v745
    %vm987 = vcmask 785408
    %v988 = vsel %vm987, %v986, %v982
    %989 = vst [vmem:[%s2] sm:$0x3] %v988
    %s990 = scalar_lea.vmem %s0, 8
    %v991 = vld [vmem:[%s990] sm:$0x3]
    %992 = vrot.lane.b32.xlu0 %v975, 64
    %v993 = vpop.permute.xlu0 %992
    %v994 = vsel %vm55, %v993, 0
    %996 = vmatpush.msra.mxu0 0.0
    %997 = vmatpush.msra.mxu0 0.0
    %998 = vmatpush.msra.mxu0 0.0
    %999 = vmatpush.msra.mxu0 0.0
    %1000 = vmatpush.msra.mxu0 0.0
    %1001 = vmatpush.msra.mxu0 0.0
    %1002 = vmatpush.msra.mxu0 0.0
    %1003 = vmatpush.msra.mxu0 0.0
    %1004 = vmatpush.msra.mxu0 0.0
    %1005 = vmatpush.msra.mxu0 0.0
    %1006 = vmatpush.msra.mxu0 0.0
    %1007 = vmatpush.msra.mxu0 0.0
    %v1008 = vand.u32 %v51, 4294901760
    %1009 = vmatpush.msra.mxu0 %v1008
    %v1010 = vand.u32 %v50, 4294901760
    %1011 = vmatpush.msra.mxu0 %v1010
    %v1012 = vand.u32 %v49, 4294901760
    %1013 = vmatpush.msra.mxu0 %v1012
    %v1014 = vand.u32 %v48, 4294901760
    %1015 = vmatpush.msra.mxu0 %v1014
    %v1016 = vand.u32 %v994, 4294901760
    %v1017 = vsub.f32 %v994, %v1016
    %v1018 = vand.u32 %v1017, 4294901760
    %v1019 = vsub.f32 %v1017, %v1018
    %v1020 = vand.u32 %v1019, 4294901760
    %1021 = vmatmul.f32.gmra.mxu0 %v1020
    %v1022 = vpop.f32.mrf.mxu0
    %v1023 = vadd.f32 0.0, %v1022
    %1024 = vdwg.mxu0
    %1025 = vmatpush.msra.mxu0 0.0
    %1026 = vmatpush.msra.mxu0 0.0
    %1027 = vmatpush.msra.mxu0 0.0
    %1028 = vmatpush.msra.mxu0 0.0
    %1029 = vmatpush.msra.mxu0 0.0
    %1030 = vmatpush.msra.mxu0 0.0
    %1031 = vmatpush.msra.mxu0 0.0
    %1032 = vmatpush.msra.mxu0 0.0
    %1033 = vmatpush.msra.mxu0 0.0
    %1034 = vmatpush.msra.mxu0 0.0
    %1035 = vmatpush.msra.mxu0 0.0
    %1036 = vmatpush.msra.mxu0 0.0
    %v1037 = vand.u32 %v51, 4294901760
    %v1038 = vsub.f32 %v51, %v1037
    %v1039 = vand.u32 %v1038, 4294901760
    %v1040 = vsub.f32 %v1038, %v1039
    %v1041 = vand.u32 %v1040, 4294901760
    %1042 = vmatpush.msra.mxu0 %v1041
    %v1043 = vand.u32 %v50, 4294901760
    %v1044 = vsub.f32 %v50, %v1043
    %v1045 = vand.u32 %v1044, 4294901760
    %v1046 = vsub.f32 %v1044, %v1045
    %v1047 = vand.u32 %v1046, 4294901760
    %1048 = vmatpush.msra.mxu0 %v1047
    %v1049 = vand.u32 %v49, 4294901760
    %v1050 = vsub.f32 %v49, %v1049
    %v1051 = vand.u32 %v1050, 4294901760
    %v1052 = vsub.f32 %v1050, %v1051
    %v1053 = vand.u32 %v1052, 4294901760
    %1054 = vmatpush.msra.mxu0 %v1053
    %v1055 = vand.u32 %v48, 4294901760
    %v1056 = vsub.f32 %v48, %v1055
    %v1057 = vand.u32 %v1056, 4294901760
    %v1058 = vsub.f32 %v1056, %v1057
    %v1059 = vand.u32 %v1058, 4294901760
    %1060 = vmatpush.msra.mxu0 %v1059
    %v1061 = vand.u32 %v994, 4294901760
    %1062 = vmatmul.f32.gmra.mxu0 %v1061
    %v1063 = vpop.f32.mrf.mxu0
    %v1064 = vadd.f32 %v1023, %v1063
    %1065 = vdwg.mxu0
    %1066 = vmatpush.msra.mxu0 0.0
    %1067 = vmatpush.msra.mxu0 0.0
    %1068 = vmatpush.msra.mxu0 0.0
    %1069 = vmatpush.msra.mxu0 0.0
    %1070 = vmatpush.msra.mxu0 0.0
    %1071 = vmatpush.msra.mxu0 0.0
    %1072 = vmatpush.msra.mxu0 0.0
    %1073 = vmatpush.msra.mxu0 0.0
    %1074 = vmatpush.msra.mxu0 0.0
    %1075 = vmatpush.msra.mxu0 0.0
    %1076 = vmatpush.msra.mxu0 0.0
    %1077 = vmatpush.msra.mxu0 0.0
    %v1078 = vand.u32 %v51, 4294901760
    %v1079 = vsub.f32 %v51, %v1078
    %1080 = vmatpush.msra.mxu0 %v1079
    %v1081 = vand.u32 %v50, 4294901760
    %v1082 = vsub.f32 %v50, %v1081
    %1083 = vmatpush.msra.mxu0 %v1082
    %v1084 = vand.u32 %v49, 4294901760
    %v1085 = vsub.f32 %v49, %v1084
    %1086 = vmatpush.msra.mxu0 %v1085
    %v1087 = vand.u32 %v48, 4294901760
    %v1088 = vsub.f32 %v48, %v1087
    %1089 = vmatpush.msra.mxu0 %v1088
    %v1090 = vand.u32 %v994, 4294901760
    %v1091 = vsub.f32 %v994, %v1090
    %1092 = vmatmul.f32.gmra.mxu0 %v1091
    %v1093 = vpop.f32.mrf.mxu0
    %v1094 = vadd.f32 %v1064, %v1093
    %1095 = vdwg.mxu0
    %1096 = vmatpush.msra.mxu0 0.0
    %1097 = vmatpush.msra.mxu0 0.0
    %1098 = vmatpush.msra.mxu0 0.0
    %1099 = vmatpush.msra.mxu0 0.0
    %1100 = vmatpush.msra.mxu0 0.0
    %1101 = vmatpush.msra.mxu0 0.0
    %1102 = vmatpush.msra.mxu0 0.0
    %1103 = vmatpush.msra.mxu0 0.0
    %1104 = vmatpush.msra.mxu0 0.0
    %1105 = vmatpush.msra.mxu0 0.0
    %1106 = vmatpush.msra.mxu0 0.0
    %1107 = vmatpush.msra.mxu0 0.0
    %v1108 = vand.u32 %v51, 4294901760
    %1109 = vmatpush.msra.mxu0 %v1108
    %v1110 = vand.u32 %v50, 4294901760
    %1111 = vmatpush.msra.mxu0 %v1110
    %v1112 = vand.u32 %v49, 4294901760
    %1113 = vmatpush.msra.mxu0 %v1112
    %v1114 = vand.u32 %v48, 4294901760
    %1115 = vmatpush.msra.mxu0 %v1114
    %v1116 = vand.u32 %v994, 4294901760
    %v1117 = vsub.f32 %v994, %v1116
    %v1118 = vand.u32 %v1117, 4294901760
    %1119 = vmatmul.f32.gmra.mxu0 %v1118
    %v1120 = vpop.f32.mrf.mxu0
    %v1121 = vadd.f32 %v1094, %v1120
    %1122 = vdwg.mxu0
    %1123 = vmatpush.msra.mxu0 0.0
    %1124 = vmatpush.msra.mxu0 0.0
    %1125 = vmatpush.msra.mxu0 0.0
    %1126 = vmatpush.msra.mxu0 0.0
    %1127 = vmatpush.msra.mxu0 0.0
    %1128 = vmatpush.msra.mxu0 0.0
    %1129 = vmatpush.msra.mxu0 0.0
    %1130 = vmatpush.msra.mxu0 0.0
    %1131 = vmatpush.msra.mxu0 0.0
    %1132 = vmatpush.msra.mxu0 0.0
    %1133 = vmatpush.msra.mxu0 0.0
    %1134 = vmatpush.msra.mxu0 0.0
    %v1135 = vand.u32 %v51, 4294901760
    %v1136 = vsub.f32 %v51, %v1135
    %v1137 = vand.u32 %v1136, 4294901760
    %1138 = vmatpush.msra.mxu0 %v1137
    %v1139 = vand.u32 %v50, 4294901760
    %v1140 = vsub.f32 %v50, %v1139
    %v1141 = vand.u32 %v1140, 4294901760
    %1142 = vmatpush.msra.mxu0 %v1141
    %v1143 = vand.u32 %v49, 4294901760
    %v1144 = vsub.f32 %v49, %v1143
    %v1145 = vand.u32 %v1144, 4294901760
    %1146 = vmatpush.msra.mxu0 %v1145
    %v1147 = vand.u32 %v48, 4294901760
    %v1148 = vsub.f32 %v48, %v1147
    %v1149 = vand.u32 %v1148, 4294901760
    %1150 = vmatpush.msra.mxu0 %v1149
    %v1151 = vand.u32 %v994, 4294901760
    %1152 = vmatmul.f32.gmra.mxu0 %v1151
    %v1153 = vpop.f32.mrf.mxu0
    %v1154 = vadd.f32 %v1121, %v1153
    %1155 = vdwg.mxu0
    %1156 = vmatpush.msra.mxu0 0.0
    %1157 = vmatpush.msra.mxu0 0.0
    %1158 = vmatpush.msra.mxu0 0.0
    %1159 = vmatpush.msra.mxu0 0.0
    %1160 = vmatpush.msra.mxu0 0.0
    %1161 = vmatpush.msra.mxu0 0.0
    %1162 = vmatpush.msra.mxu0 0.0
    %1163 = vmatpush.msra.mxu0 0.0
    %1164 = vmatpush.msra.mxu0 0.0
    %1165 = vmatpush.msra.mxu0 0.0
    %1166 = vmatpush.msra.mxu0 0.0
    %1167 = vmatpush.msra.mxu0 0.0
    %v1168 = vand.u32 %v51, 4294901760
    %1169 = vmatpush.msra.mxu0 %v1168
    %v1170 = vand.u32 %v50, 4294901760
    %1171 = vmatpush.msra.mxu0 %v1170
    %v1172 = vand.u32 %v49, 4294901760
    %1173 = vmatpush.msra.mxu0 %v1172
    %v1174 = vand.u32 %v48, 4294901760
    %1175 = vmatpush.msra.mxu0 %v1174
    %v1176 = vand.u32 %v994, 4294901760
    %1177 = vmatmul.f32.gmra.mxu0 %v1176
    %v1178 = vpop.f32.mrf.mxu0
    %v1179 = vadd.f32 %v1154, %v1178
    %1180 = vdwg.mxu0
    %v1181 = vadd.f32 %v991, %v1179
    %v1182 = vxor.u32 %v1181, 2147483648
    %v1183 = vmul.f32 %v1182, 1.442695
    %v1184 = vpow.pop %v1183
    %v1185 = vadd.f32 %v1184, 1.0
    %v1186 = vrcp.pop %v1185
    %v1187 = vmul.f32 %v1185, %v1186
    %v1188 = vsub.f32 1.0, %v1187
    %v1189 = vmul.f32 %v1186, %v1188
    %v1190 = vadd.f32 %v1186, %v1189
    %vm1191 = vweird.f32 %v1185
    %vm1192 = vweird.f32 %v1186
    %vm1193 = vmor %vm1191, %vm1192
    %v1194 = vsel %vm1193, %v1186, %v1190
    %v1195 = vand.u32 2147483647, %v1185
    %vm1196 = vcmp.eq.f32.partialorder %v1195, 8.507059e+37
    %v1197 = vand.u32 %v1185, 2147483648
    %v1198 = vor.u32 1.1754944e-38, %v1197
    %v1199 = vsel %vm1196, %v1198, %v1194
    %v1200 = vmul.f32 1.0, %v1199
    %v1201 = vtanh.pop %v1181
    %v1202 = vmul.f32 %v1200, %v969
    %1204 = vrot.lane.b32.xlu0 %v1201, 32
    %v1205 = vpop.permute.xlu0 %1204
    %v1207 = vmul.f32 %v1200, %v1205
    %1209 = vrot.lane.b32.xlu0 %v1207, 32
    %v1210 = vpop.permute.xlu0 %1209
    %v1212 = vadd.f32 %v1202, %v1210
    %v1213 = vtanh.pop %v1212
    %1215 = vrot.lane.b32.xlu0 %v1213, 32
    %v1216 = vpop.permute.xlu0 %1215
    %v1218 = vmul.f32 %v1200, %v1216
    %s1219 = scalar_lea.vmem %s0, 10
    %v1220 = vld [vmem:[%s1219] sm:$0x3]
    %1222 = vrot.lane.b32.xlu0 %v1218, 64
    %v1223 = vpop.permute.xlu0 %1222
    %v1224 = vsel %vm55, %v1223, 0
    %1226 = vmatpush.msra.mxu0 0.0
    %1227 = vmatpush.msra.mxu0 0.0
    %1228 = vmatpush.msra.mxu0 0.0
    %1229 = vmatpush.msra.mxu0 0.0
    %1230 = vmatpush.msra.mxu0 0.0
    %1231 = vmatpush.msra.mxu0 0.0
    %1232 = vmatpush.msra.mxu0 0.0
    %1233 = vmatpush.msra.mxu0 0.0
    %1234 = vmatpush.msra.mxu0 0.0
    %1235 = vmatpush.msra.mxu0 0.0
    %1236 = vmatpush.msra.mxu0 0.0
    %1237 = vmatpush.msra.mxu0 0.0
    %v1238 = vand.u32 %v51, 4294901760
    %1239 = vmatpush.msra.mxu0 %v1238
    %v1240 = vand.u32 %v50, 4294901760
    %1241 = vmatpush.msra.mxu0 %v1240
    %v1242 = vand.u32 %v49, 4294901760
    %1243 = vmatpush.msra.mxu0 %v1242
    %v1244 = vand.u32 %v48, 4294901760
    %1245 = vmatpush.msra.mxu0 %v1244
    %v1246 = vand.u32 %v1224, 4294901760
    %v1247 = vsub.f32 %v1224, %v1246
    %v1248 = vand.u32 %v1247, 4294901760
    %v1249 = vsub.f32 %v1247, %v1248
    %v1250 = vand.u32 %v1249, 4294901760
    %1251 = vmatmul.f32.gmra.mxu0 %v1250
    %v1252 = vpop.f32.mrf.mxu0
    %v1253 = vadd.f32 0.0, %v1252
    %1254 = vdwg.mxu0
    %1255 = vmatpush.msra.mxu0 0.0
    %1256 = vmatpush.msra.mxu0 0.0
    %1257 = vmatpush.msra.mxu0 0.0
    %1258 = vmatpush.msra.mxu0 0.0
    %1259 = vmatpush.msra.mxu0 0.0
    %1260 = vmatpush.msra.mxu0 0.0
    %1261 = vmatpush.msra.mxu0 0.0
    %1262 = vmatpush.msra.mxu0 0.0
    %1263 = vmatpush.msra.mxu0 0.0
    %1264 = vmatpush.msra.mxu0 0.0
    %1265 = vmatpush.msra.mxu0 0.0
    %1266 = vmatpush.msra.mxu0 0.0
    %v1267 = vand.u32 %v51, 4294901760
    %v1268 = vsub.f32 %v51, %v1267
    %v1269 = vand.u32 %v1268, 4294901760
    %v1270 = vsub.f32 %v1268, %v1269
    %v1271 = vand.u32 %v1270, 4294901760
    %1272 = vmatpush.msra.mxu0 %v1271
    %v1273 = vand.u32 %v50, 4294901760
    %v1274 = vsub.f32 %v50, %v1273
    %v1275 = vand.u32 %v1274, 4294901760
    %v1276 = vsub.f32 %v1274, %v1275
    %v1277 = vand.u32 %v1276, 4294901760
    %1278 = vmatpush.msra.mxu0 %v1277
    %v1279 = vand.u32 %v49, 4294901760
    %v1280 = vsub.f32 %v49, %v1279
    %v1281 = vand.u32 %v1280, 4294901760
    %v1282 = vsub.f32 %v1280, %v1281
    %v1283 = vand.u32 %v1282, 4294901760
    %1284 = vmatpush.msra.mxu0 %v1283
    %v1285 = vand.u32 %v48, 4294901760
    %v1286 = vsub.f32 %v48, %v1285
    %v1287 = vand.u32 %v1286, 4294901760
    %v1288 = vsub.f32 %v1286, %v1287
    %v1289 = vand.u32 %v1288, 4294901760
    %1290 = vmatpush.msra.mxu0 %v1289
    %v1291 = vand.u32 %v1224, 4294901760
    %1292 = vmatmul.f32.gmra.mxu0 %v1291
    %v1293 = vpop.f32.mrf.mxu0
    %v1294 = vadd.f32 %v1253, %v1293
    %1295 = vdwg.mxu0
    %1296 = vmatpush.msra.mxu0 0.0
    %1297 = vmatpush.msra.mxu0 0.0
    %1298 = vmatpush.msra.mxu0 0.0
    %1299 = vmatpush.msra.mxu0 0.0
    %1300 = vmatpush.msra.mxu0 0.0
    %1301 = vmatpush.msra.mxu0 0.0
    %1302 = vmatpush.msra.mxu0 0.0
    %1303 = vmatpush.msra.mxu0 0.0
    %1304 = vmatpush.msra.mxu0 0.0
    %1305 = vmatpush.msra.mxu0 0.0
    %1306 = vmatpush.msra.mxu0 0.0
    %1307 = vmatpush.msra.mxu0 0.0
    %v1308 = vand.u32 %v51, 4294901760
    %v1309 = vsub.f32 %v51, %v1308
    %1310 = vmatpush.msra.mxu0 %v1309
    %v1311 = vand.u32 %v50, 4294901760
    %v1312 = vsub.f32 %v50, %v1311
    %1313 = vmatpush.msra.mxu0 %v1312
    %v1314 = vand.u32 %v49, 4294901760
    %v1315 = vsub.f32 %v49, %v1314
    %1316 = vmatpush.msra.mxu0 %v1315
    %v1317 = vand.u32 %v48, 4294901760
    %v1318 = vsub.f32 %v48, %v1317
    %1319 = vmatpush.msra.mxu0 %v1318
    %v1320 = vand.u32 %v1224, 4294901760
    %v1321 = vsub.f32 %v1224, %v1320
    %1322 = vmatmul.f32.gmra.mxu0 %v1321
    %v1323 = vpop.f32.mrf.mxu0
    %v1324 = vadd.f32 %v1294, %v1323
    %1325 = vdwg.mxu0
    %1326 = vmatpush.msra.mxu0 0.0
    %1327 = vmatpush.msra.mxu0 0.0
    %1328 = vmatpush.msra.mxu0 0.0
    %1329 = vmatpush.msra.mxu0 0.0
    %1330 = vmatpush.msra.mxu0 0.0
    %1331 = vmatpush.msra.mxu0 0.0
    %1332 = vmatpush.msra.mxu0 0.0
    %1333 = vmatpush.msra.mxu0 0.0
    %1334 = vmatpush.msra.mxu0 0.0
    %1335 = vmatpush.msra.mxu0 0.0
    %1336 = vmatpush.msra.mxu0 0.0
    %1337 = vmatpush.msra.mxu0 0.0
    %v1338 = vand.u32 %v51, 4294901760
    %1339 = vmatpush.msra.mxu0 %v1338
    %v1340 = vand.u32 %v50, 4294901760
    %1341 = vmatpush.msra.mxu0 %v1340
    %v1342 = vand.u32 %v49, 4294901760
    %1343 = vmatpush.msra.mxu0 %v1342
    %v1344 = vand.u32 %v48, 4294901760
    %1345 = vmatpush.msra.mxu0 %v1344
    %v1346 = vand.u32 %v1224, 4294901760
    %v1347 = vsub.f32 %v1224, %v1346
    %v1348 = vand.u32 %v1347, 4294901760
    %1349 = vmatmul.f32.gmra.mxu0 %v1348
    %v1350 = vpop.f32.mrf.mxu0
    %v1351 = vadd.f32 %v1324, %v1350
    %1352 = vdwg.mxu0
    %1353 = vmatpush.msra.mxu0 0.0
    %1354 = vmatpush.msra.mxu0 0.0
    %1355 = vmatpush.msra.mxu0 0.0
    %1356 = vmatpush.msra.mxu0 0.0
    %1357 = vmatpush.msra.mxu0 0.0
    %1358 = vmatpush.msra.mxu0 0.0
    %1359 = vmatpush.msra.mxu0 0.0
    %1360 = vmatpush.msra.mxu0 0.0
    %1361 = vmatpush.msra.mxu0 0.0
    %1362 = vmatpush.msra.mxu0 0.0
    %1363 = vmatpush.msra.mxu0 0.0
    %1364 = vmatpush.msra.mxu0 0.0
    %v1365 = vand.u32 %v51, 4294901760
    %v1366 = vsub.f32 %v51, %v1365
    %v1367 = vand.u32 %v1366, 4294901760
    %1368 = vmatpush.msra.mxu0 %v1367
    %v1369 = vand.u32 %v50, 4294901760
    %v1370 = vsub.f32 %v50, %v1369
    %v1371 = vand.u32 %v1370, 4294901760
    %1372 = vmatpush.msra.mxu0 %v1371
    %v1373 = vand.u32 %v49, 4294901760
    %v1374 = vsub.f32 %v49, %v1373
    %v1375 = vand.u32 %v1374, 4294901760
    %1376 = vmatpush.msra.mxu0 %v1375
    %v1377 = vand.u32 %v48, 4294901760
    %v1378 = vsub.f32 %v48, %v1377
    %v1379 = vand.u32 %v1378, 4294901760
    %1380 = vmatpush.msra.mxu0 %v1379
    %v1381 = vand.u32 %v1224, 4294901760
    %1382 = vmatmul.f32.gmra.mxu0 %v1381
    %v1383 = vpop.f32.mrf.mxu0
    %v1384 = vadd.f32 %v1351, %v1383
    %1385 = vdwg.mxu0
    %1386 = vmatpush.msra.mxu0 0.0
    %1387 = vmatpush.msra.mxu0 0.0
    %1388 = vmatpush.msra.mxu0 0.0
    %1389 = vmatpush.msra.mxu0 0.0
    %1390 = vmatpush.msra.mxu0 0.0
    %1391 = vmatpush.msra.mxu0 0.0
    %1392 = vmatpush.msra.mxu0 0.0
    %1393 = vmatpush.msra.mxu0 0.0
    %1394 = vmatpush.msra.mxu0 0.0
    %1395 = vmatpush.msra.mxu0 0.0
    %1396 = vmatpush.msra.mxu0 0.0
    %1397 = vmatpush.msra.mxu0 0.0
    %v1398 = vand.u32 %v51, 4294901760
    %1399 = vmatpush.msra.mxu0 %v1398
    %v1400 = vand.u32 %v50, 4294901760
    %1401 = vmatpush.msra.mxu0 %v1400
    %v1402 = vand.u32 %v49, 4294901760
    %1403 = vmatpush.msra.mxu0 %v1402
    %v1404 = vand.u32 %v48, 4294901760
    %1405 = vmatpush.msra.mxu0 %v1404
    %v1406 = vand.u32 %v1224, 4294901760
    %1407 = vmatmul.f32.gmra.mxu0 %v1406
    %v1408 = vpop.f32.mrf.mxu0
    %v1409 = vadd.f32 %v1384, %v1408
    %1410 = vdwg.mxu0
    %v1411 = vadd.f32 %v1220, %v1409
    %v1412 = vxor.u32 %v1411, 2147483648
    %v1413 = vmul.f32 %v1412, 1.442695
    %v1414 = vpow.pop %v1413
    %v1415 = vadd.f32 %v1414, 1.0
    %v1416 = vrcp.pop %v1415
    %v1417 = vmul.f32 %v1415, %v1416
    %v1418 = vsub.f32 1.0, %v1417
    %v1419 = vmul.f32 %v1416, %v1418
    %v1420 = vadd.f32 %v1416, %v1419
    %vm1421 = vweird.f32 %v1415
    %vm1422 = vweird.f32 %v1416
    %vm1423 = vmor %vm1421, %vm1422
    %v1424 = vsel %vm1423, %v1416, %v1420
    %v1425 = vand.u32 2147483647, %v1415
    %vm1426 = vcmp.eq.f32.partialorder %v1425, 8.507059e+37
    %v1427 = vand.u32 %v1415, 2147483648
    %v1428 = vor.u32 1.1754944e-38, %v1427
    %v1429 = vsel %vm1426, %v1428, %v1424
    %v1430 = vmul.f32 1.0, %v1429
    %v1431 = vtanh.pop %v1411
    %v1432 = vmul.f32 %v1430, %v1212
    %1434 = vrot.lane.b32.xlu0 %v1431, 32
    %v1435 = vpop.permute.xlu0 %1434
    %v1437 = vmul.f32 %v1430, %v1435
    %1439 = vrot.lane.b32.xlu0 %v1437, 32
    %v1440 = vpop.permute.xlu0 %1439
    %v1442 = vadd.f32 %v1432, %v1440
    %v1443 = vtanh.pop %v1442
    %1445 = vrot.lane.b32.xlu0 %v1443, 32
    %v1446 = vpop.permute.xlu0 %1445
    %v1448 = vmul.f32 %v1430, %v1446
    %s1449 = scalar_lea.vmem %s0, 12
    %v1450 = vld [vmem:[%s1449] sm:$0x3]
    %1452 = vrot.lane.b32.xlu0 %v1448, 64
    %v1453 = vpop.permute.xlu0 %1452
    %v1454 = vsel %vm55, %v1453, 0
    %1456 = vmatpush.msra.mxu0 0.0
    %1457 = vmatpush.msra.mxu0 0.0
    %1458 = vmatpush.msra.mxu0 0.0
    %1459 = vmatpush.msra.mxu0 0.0
    %1460 = vmatpush.msra.mxu0 0.0
    %1461 = vmatpush.msra.mxu0 0.0
    %1462 = vmatpush.msra.mxu0 0.0
    %1463 = vmatpush.msra.mxu0 0.0
    %1464 = vmatpush.msra.mxu0 0.0
    %1465 = vmatpush.msra.mxu0 0.0
    %1466 = vmatpush.msra.mxu0 0.0
    %1467 = vmatpush.msra.mxu0 0.0
    %v1468 = vand.u32 %v51, 4294901760
    %1469 = vmatpush.msra.mxu0 %v1468
    %v1470 = vand.u32 %v50, 4294901760
    %1471 = vmatpush.msra.mxu0 %v1470
    %v1472 = vand.u32 %v49, 4294901760
    %1473 = vmatpush.msra.mxu0 %v1472
    %v1474 = vand.u32 %v48, 4294901760
    %1475 = vmatpush.msra.mxu0 %v1474
    %v1476 = vand.u32 %v1454, 4294901760
    %v1477 = vsub.f32 %v1454, %v1476
    %v1478 = vand.u32 %v1477, 4294901760
    %v1479 = vsub.f32 %v1477, %v1478
    %v1480 = vand.u32 %v1479, 4294901760
    %1481 = vmatmul.f32.gmra.mxu0 %v1480
    %v1482 = vpop.f32.mrf.mxu0
    %v1483 = vadd.f32 0.0, %v1482
    %1484 = vdwg.mxu0
    %1485 = vmatpush.msra.mxu0 0.0
    %1486 = vmatpush.msra.mxu0 0.0
    %1487 = vmatpush.msra.mxu0 0.0
    %1488 = vmatpush.msra.mxu0 0.0
    %1489 = vmatpush.msra.mxu0 0.0
    %1490 = vmatpush.msra.mxu0 0.0
    %1491 = vmatpush.msra.mxu0 0.0
    %1492 = vmatpush.msra.mxu0 0.0
    %1493 = vmatpush.msra.mxu0 0.0
    %1494 = vmatpush.msra.mxu0 0.0
    %1495 = vmatpush.msra.mxu0 0.0
    %1496 = vmatpush.msra.mxu0 0.0
    %v1497 = vand.u32 %v51, 4294901760
    %v1498 = vsub.f32 %v51, %v1497
    %v1499 = vand.u32 %v1498, 4294901760
    %v1500 = vsub.f32 %v1498, %v1499
    %v1501 = vand.u32 %v1500, 4294901760
    %1502 = vmatpush.msra.mxu0 %v1501
    %v1503 = vand.u32 %v50, 4294901760
    %v1504 = vsub.f32 %v50, %v1503
    %v1505 = vand.u32 %v1504, 4294901760
    %v1506 = vsub.f32 %v1504, %v1505
    %v1507 = vand.u32 %v1506, 4294901760
    %1508 = vmatpush.msra.mxu0 %v1507
    %v1509 = vand.u32 %v49, 4294901760
    %v1510 = vsub.f32 %v49, %v1509
    %v1511 = vand.u32 %v1510, 4294901760
    %v1512 = vsub.f32 %v1510, %v1511
    %v1513 = vand.u32 %v1512, 4294901760
    %1514 = vmatpush.msra.mxu0 %v1513
    %v1515 = vand.u32 %v48, 4294901760
    %v1516 = vsub.f32 %v48, %v1515
    %v1517 = vand.u32 %v1516, 4294901760
    %v1518 = vsub.f32 %v1516, %v1517
    %v1519 = vand.u32 %v1518, 4294901760
    %1520 = vmatpush.msra.mxu0 %v1519
    %v1521 = vand.u32 %v1454, 4294901760
    %1522 = vmatmul.f32.gmra.mxu0 %v1521
    %v1523 = vpop.f32.mrf.mxu0
    %v1524 = vadd.f32 %v1483, %v1523
    %1525 = vdwg.mxu0
    %1526 = vmatpush.msra.mxu0 0.0
    %1527 = vmatpush.msra.mxu0 0.0
    %1528 = vmatpush.msra.mxu0 0.0
    %1529 = vmatpush.msra.mxu0 0.0
    %1530 = vmatpush.msra.mxu0 0.0
    %1531 = vmatpush.msra.mxu0 0.0
    %1532 = vmatpush.msra.mxu0 0.0
    %1533 = vmatpush.msra.mxu0 0.0
    %1534 = vmatpush.msra.mxu0 0.0
    %1535 = vmatpush.msra.mxu0 0.0
    %1536 = vmatpush.msra.mxu0 0.0
    %1537 = vmatpush.msra.mxu0 0.0
    %v1538 = vand.u32 %v51, 4294901760
    %v1539 = vsub.f32 %v51, %v1538
    %1540 = vmatpush.msra.mxu0 %v1539
    %v1541 = vand.u32 %v50, 4294901760
    %v1542 = vsub.f32 %v50, %v1541
    %1543 = vmatpush.msra.mxu0 %v1542
    %v1544 = vand.u32 %v49, 4294901760
    %v1545 = vsub.f32 %v49, %v1544
    %1546 = vmatpush.msra.mxu0 %v1545
    %v1547 = vand.u32 %v48, 4294901760
    %v1548 = vsub.f32 %v48, %v1547
    %1549 = vmatpush.msra.mxu0 %v1548
    %v1550 = vand.u32 %v1454, 4294901760
    %v1551 = vsub.f32 %v1454, %v1550
    %1552 = vmatmul.f32.gmra.mxu0 %v1551
    %v1553 = vpop.f32.mrf.mxu0
    %v1554 = vadd.f32 %v1524, %v1553
    %1555 = vdwg.mxu0
    %1556 = vmatpush.msra.mxu0 0.0
    %1557 = vmatpush.msra.mxu0 0.0
    %1558 = vmatpush.msra.mxu0 0.0
    %1559 = vmatpush.msra.mxu0 0.0
    %1560 = vmatpush.msra.mxu0 0.0
    %1561 = vmatpush.msra.mxu0 0.0
    %1562 = vmatpush.msra.mxu0 0.0
    %1563 = vmatpush.msra.mxu0 0.0
    %1564 = vmatpush.msra.mxu0 0.0
    %1565 = vmatpush.msra.mxu0 0.0
    %1566 = vmatpush.msra.mxu0 0.0
    %1567 = vmatpush.msra.mxu0 0.0
    %v1568 = vand.u32 %v51, 4294901760
    %1569 = vmatpush.msra.mxu0 %v1568
    %v1570 = vand.u32 %v50, 4294901760
    %1571 = vmatpush.msra.mxu0 %v1570
    %v1572 = vand.u32 %v49, 4294901760
    %1573 = vmatpush.msra.mxu0 %v1572
    %v1574 = vand.u32 %v48, 4294901760
    %1575 = vmatpush.msra.mxu0 %v1574
    %v1576 = vand.u32 %v1454, 4294901760
    %v1577 = vsub.f32 %v1454, %v1576
    %v1578 = vand.u32 %v1577, 4294901760
    %1579 = vmatmul.f32.gmra.mxu0 %v1578
    %v1580 = vpop.f32.mrf.mxu0
    %v1581 = vadd.f32 %v1554, %v1580
    %1582 = vdwg.mxu0
    %1583 = vmatpush.msra.mxu0 0.0
    %1584 = vmatpush.msra.mxu0 0.0
    %1585 = vmatpush.msra.mxu0 0.0
    %1586 = vmatpush.msra.mxu0 0.0
    %1587 = vmatpush.msra.mxu0 0.0
    %1588 = vmatpush.msra.mxu0 0.0
    %1589 = vmatpush.msra.mxu0 0.0
    %1590 = vmatpush.msra.mxu0 0.0
    %1591 = vmatpush.msra.mxu0 0.0
    %1592 = vmatpush.msra.mxu0 0.0
    %1593 = vmatpush.msra.mxu0 0.0
    %1594 = vmatpush.msra.mxu0 0.0
    %v1595 = vand.u32 %v51, 4294901760
    %v1596 = vsub.f32 %v51, %v1595
    %v1597 = vand.u32 %v1596, 4294901760
    %1598 = vmatpush.msra.mxu0 %v1597
    %v1599 = vand.u32 %v50, 4294901760
    %v1600 = vsub.f32 %v50, %v1599
    %v1601 = vand.u32 %v1600, 4294901760
    %1602 = vmatpush.msra.mxu0 %v1601
    %v1603 = vand.u32 %v49, 4294901760
    %v1604 = vsub.f32 %v49, %v1603
    %v1605 = vand.u32 %v1604, 4294901760
    %1606 = vmatpush.msra.mxu0 %v1605
    %v1607 = vand.u32 %v48, 4294901760
    %v1608 = vsub.f32 %v48, %v1607
    %v1609 = vand.u32 %v1608, 4294901760
    %1610 = vmatpush.msra.mxu0 %v1609
    %v1611 = vand.u32 %v1454, 4294901760
    %1612 = vmatmul.f32.gmra.mxu0 %v1611
    %v1613 = vpop.f32.mrf.mxu0
    %v1614 = vadd.f32 %v1581, %v1613
    %1615 = vdwg.mxu0
    %1616 = vmatpush.msra.mxu0 0.0
    %1617 = vmatpush.msra.mxu0 0.0
    %1618 = vmatpush.msra.mxu0 0.0
    %1619 = vmatpush.msra.mxu0 0.0
    %1620 = vmatpush.msra.mxu0 0.0
    %1621 = vmatpush.msra.mxu0 0.0
    %1622 = vmatpush.msra.mxu0 0.0
    %1623 = vmatpush.msra.mxu0 0.0
    %1624 = vmatpush.msra.mxu0 0.0
    %1625 = vmatpush.msra.mxu0 0.0
    %1626 = vmatpush.msra.mxu0 0.0
    %1627 = vmatpush.msra.mxu0 0.0
    %v1628 = vand.u32 %v51, 4294901760
    %1629 = vmatpush.msra.mxu0 %v1628
    %v1630 = vand.u32 %v50, 4294901760
    %1631 = vmatpush.msra.mxu0 %v1630
    %v1632 = vand.u32 %v49, 4294901760
    %1633 = vmatpush.msra.mxu0 %v1632
    %v1634 = vand.u32 %v48, 4294901760
    %1635 = vmatpush.msra.mxu0 %v1634
    %v1636 = vand.u32 %v1454, 4294901760
    %1637 = vmatmul.f32.gmra.mxu0 %v1636
    %v1638 = vpop.f32.mrf.mxu0
    %v1639 = vadd.f32 %v1614, %v1638
    %1640 = vdwg.mxu0
    %v1641 = vadd.f32 %v1450, %v1639
    %v1642 = vxor.u32 %v1641, 2147483648
    %v1643 = vmul.f32 %v1642, 1.442695
    %v1644 = vpow.pop %v1643
    %v1645 = vadd.f32 %v1644, 1.0
    %v1646 = vrcp.pop %v1645
    %v1647 = vmul.f32 %v1645, %v1646
    %v1648 = vsub.f32 1.0, %v1647
    %v1649 = vmul.f32 %v1646, %v1648
    %v1650 = vadd.f32 %v1646, %v1649
    %vm1651 = vweird.f32 %v1645
    %vm1652 = vweird.f32 %v1646
    %vm1653 = vmor %vm1651, %vm1652
    %v1654 = vsel %vm1653, %v1646, %v1650
    %v1655 = vand.u32 2147483647, %v1645
    %vm1656 = vcmp.eq.f32.partialorder %v1655, 8.507059e+37
    %v1657 = vand.u32 %v1645, 2147483648
    %v1658 = vor.u32 1.1754944e-38, %v1657
    %v1659 = vsel %vm1656, %v1658, %v1654
    %v1660 = vmul.f32 1.0, %v1659
    %v1661 = vtanh.pop %v1641
    %v1662 = vmul.f32 %v1660, %v1442
    %1664 = vrot.lane.b32.xlu0 %v1661, 32
    %v1665 = vpop.permute.xlu0 %1664
    %v1667 = vmul.f32 %v1660, %v1665
    %1669 = vrot.lane.b32.xlu0 %v1667, 32
    %v1670 = vpop.permute.xlu0 %1669
    %v1672 = vadd.f32 %v1662, %v1670
    %v1673 = vtanh.pop %v1672
    %1675 = vrot.lane.b32.xlu0 %v1673, 32
    %v1676 = vpop.permute.xlu0 %1675
    %v1678 = vmul.f32 %v1660, %v1676
    %s1679 = scalar_lea.vmem %s0, 14
    %v1680 = vld [vmem:[%s1679] sm:$0x3]
    %1682 = vrot.lane.b32.xlu0 %v1678, 64
    %v1683 = vpop.permute.xlu0 %1682
    %v1684 = vsel %vm55, %v1683, 0
    %1686 = vmatpush.msra.mxu0 0.0
    %1687 = vmatpush.msra.mxu0 0.0
    %1688 = vmatpush.msra.mxu0 0.0
    %1689 = vmatpush.msra.mxu0 0.0
    %1690 = vmatpush.msra.mxu0 0.0
    %1691 = vmatpush.msra.mxu0 0.0
    %1692 = vmatpush.msra.mxu0 0.0
    %1693 = vmatpush.msra.mxu0 0.0
    %1694 = vmatpush.msra.mxu0 0.0
    %1695 = vmatpush.msra.mxu0 0.0
    %1696 = vmatpush.msra.mxu0 0.0
    %1697 = vmatpush.msra.mxu0 0.0
    %v1698 = vand.u32 %v51, 4294901760
    %1699 = vmatpush.msra.mxu0 %v1698
    %v1700 = vand.u32 %v50, 4294901760
    %1701 = vmatpush.msra.mxu0 %v1700
    %v1702 = vand.u32 %v49, 4294901760
    %1703 = vmatpush.msra.mxu0 %v1702
    %v1704 = vand.u32 %v48, 4294901760
    %1705 = vmatpush.msra.mxu0 %v1704
    %v1706 = vand.u32 %v1684, 4294901760
    %v1707 = vsub.f32 %v1684, %v1706
    %v1708 = vand.u32 %v1707, 4294901760
    %v1709 = vsub.f32 %v1707, %v1708
    %v1710 = vand.u32 %v1709, 4294901760
    %1711 = vmatmul.f32.gmra.mxu0 %v1710
    %v1712 = vpop.f32.mrf.mxu0
    %v1713 = vadd.f32 0.0, %v1712
    %1714 = vdwg.mxu0
    %1715 = vmatpush.msra.mxu0 0.0
    %1716 = vmatpush.msra.mxu0 0.0
    %1717 = vmatpush.msra.mxu0 0.0
    %1718 = vmatpush.msra.mxu0 0.0
    %1719 = vmatpush.msra.mxu0 0.0
    %1720 = vmatpush.msra.mxu0 0.0
    %1721 = vmatpush.msra.mxu0 0.0
    %1722 = vmatpush.msra.mxu0 0.0
    %1723 = vmatpush.msra.mxu0 0.0
    %1724 = vmatpush.msra.mxu0 0.0
    %1725 = vmatpush.msra.mxu0 0.0
    %1726 = vmatpush.msra.mxu0 0.0
    %v1727 = vand.u32 %v51, 4294901760
    %v1728 = vsub.f32 %v51, %v1727
    %v1729 = vand.u32 %v1728, 4294901760
    %v1730 = vsub.f32 %v1728, %v1729
    %v1731 = vand.u32 %v1730, 4294901760
    %1732 = vmatpush.msra.mxu0 %v1731
    %v1733 = vand.u32 %v50, 4294901760
    %v1734 = vsub.f32 %v50, %v1733
    %v1735 = vand.u32 %v1734, 4294901760
    %v1736 = vsub.f32 %v1734, %v1735
    %v1737 = vand.u32 %v1736, 4294901760
    %1738 = vmatpush.msra.mxu0 %v1737
    %v1739 = vand.u32 %v49, 4294901760
    %v1740 = vsub.f32 %v49, %v1739
    %v1741 = vand.u32 %v1740, 4294901760
    %v1742 = vsub.f32 %v1740, %v1741
    %v1743 = vand.u32 %v1742, 4294901760
    %1744 = vmatpush.msra.mxu0 %v1743
    %v1745 = vand.u32 %v48, 4294901760
    %v1746 = vsub.f32 %v48, %v1745
    %v1747 = vand.u32 %v1746, 4294901760
    %v1748 = vsub.f32 %v1746, %v1747
    %v1749 = vand.u32 %v1748, 4294901760
    %1750 = vmatpush.msra.mxu0 %v1749
    %v1751 = vand.u32 %v1684, 4294901760
    %1752 = vmatmul.f32.gmra.mxu0 %v1751
    %v1753 = vpop.f32.mrf.mxu0
    %v1754 = vadd.f32 %v1713, %v1753
    %1755 = vdwg.mxu0
    %1756 = vmatpush.msra.mxu0 0.0
    %1757 = vmatpush.msra.mxu0 0.0
    %1758 = vmatpush.msra.mxu0 0.0
    %1759 = vmatpush.msra.mxu0 0.0
    %1760 = vmatpush.msra.mxu0 0.0
    %1761 = vmatpush.msra.mxu0 0.0
    %1762 = vmatpush.msra.mxu0 0.0
    %1763 = vmatpush.msra.mxu0 0.0
    %1764 = vmatpush.msra.mxu0 0.0
    %1765 = vmatpush.msra.mxu0 0.0
    %1766 = vmatpush.msra.mxu0 0.0
    %1767 = vmatpush.msra.mxu0 0.0
    %v1768 = vand.u32 %v51, 4294901760
    %v1769 = vsub.f32 %v51, %v1768
    %1770 = vmatpush.msra.mxu0 %v1769
    %v1771 = vand.u32 %v50, 4294901760
    %v1772 = vsub.f32 %v50, %v1771
    %1773 = vmatpush.msra.mxu0 %v1772
    %v1774 = vand.u32 %v49, 4294901760
    %v1775 = vsub.f32 %v49, %v1774
    %1776 = vmatpush.msra.mxu0 %v1775
    %v1777 = vand.u32 %v48, 4294901760
    %v1778 = vsub.f32 %v48, %v1777
    %1779 = vmatpush.msra.mxu0 %v1778
    %v1780 = vand.u32 %v1684, 4294901760
    %v1781 = vsub.f32 %v1684, %v1780
    %1782 = vmatmul.f32.gmra.mxu0 %v1781
    %v1783 = vpop.f32.mrf.mxu0
    %v1784 = vadd.f32 %v1754, %v1783
    %1785 = vdwg.mxu0
    %1786 = vmatpush.msra.mxu0 0.0
    %1787 = vmatpush.msra.mxu0 0.0
    %1788 = vmatpush.msra.mxu0 0.0
    %1789 = vmatpush.msra.mxu0 0.0
    %1790 = vmatpush.msra.mxu0 0.0
    %1791 = vmatpush.msra.mxu0 0.0
    %1792 = vmatpush.msra.mxu0 0.0
    %1793 = vmatpush.msra.mxu0 0.0
    %1794 = vmatpush.msra.mxu0 0.0
    %1795 = vmatpush.msra.mxu0 0.0
    %1796 = vmatpush.msra.mxu0 0.0
    %1797 = vmatpush.msra.mxu0 0.0
    %v1798 = vand.u32 %v51, 4294901760
    %1799 = vmatpush.msra.mxu0 %v1798
    %v1800 = vand.u32 %v50, 4294901760
    %1801 = vmatpush.msra.mxu0 %v1800
    %v1802 = vand.u32 %v49, 4294901760
    %1803 = vmatpush.msra.mxu0 %v1802
    %v1804 = vand.u32 %v48, 4294901760
    %1805 = vmatpush.msra.mxu0 %v1804
    %v1806 = vand.u32 %v1684, 4294901760
    %v1807 = vsub.f32 %v1684, %v1806
    %v1808 = vand.u32 %v1807, 4294901760
    %1809 = vmatmul.f32.gmra.mxu0 %v1808
    %v1810 = vpop.f32.mrf.mxu0
    %v1811 = vadd.f32 %v1784, %v1810
    %1812 = vdwg.mxu0
    %1813 = vmatpush.msra.mxu0 0.0
    %1814 = vmatpush.msra.mxu0 0.0
    %1815 = vmatpush.msra.mxu0 0.0
    %1816 = vmatpush.msra.mxu0 0.0
    %1817 = vmatpush.msra.mxu0 0.0
    %1818 = vmatpush.msra.mxu0 0.0
    %1819 = vmatpush.msra.mxu0 0.0
    %1820 = vmatpush.msra.mxu0 0.0
    %1821 = vmatpush.msra.mxu0 0.0
    %1822 = vmatpush.msra.mxu0 0.0
    %1823 = vmatpush.msra.mxu0 0.0
    %1824 = vmatpush.msra.mxu0 0.0
    %v1825 = vand.u32 %v51, 4294901760
    %v1826 = vsub.f32 %v51, %v1825
    %v1827 = vand.u32 %v1826, 4294901760
    %1828 = vmatpush.msra.mxu0 %v1827
    %v1829 = vand.u32 %v50, 4294901760
    %v1830 = vsub.f32 %v50, %v1829
    %v1831 = vand.u32 %v1830, 4294901760
    %1832 = vmatpush.msra.mxu0 %v1831
    %v1833 = vand.u32 %v49, 4294901760
    %v1834 = vsub.f32 %v49, %v1833
    %v1835 = vand.u32 %v1834, 4294901760
    %1836 = vmatpush.msra.mxu0 %v1835
    %v1837 = vand.u32 %v48, 4294901760
    %v1838 = vsub.f32 %v48, %v1837
    %v1839 = vand.u32 %v1838, 4294901760
    %1840 = vmatpush.msra.mxu0 %v1839
    %v1841 = vand.u32 %v1684, 4294901760
    %1842 = vmatmul.f32.gmra.mxu0 %v1841
    %v1843 = vpop.f32.mrf.mxu0
    %v1844 = vadd.f32 %v1811, %v1843
    %1845 = vdwg.mxu0
    %1846 = vmatpush.msra.mxu0 0.0
    %1847 = vmatpush.msra.mxu0 0.0
    %1848 = vmatpush.msra.mxu0 0.0
    %1849 = vmatpush.msra.mxu0 0.0
    %1850 = vmatpush.msra.mxu0 0.0
    %1851 = vmatpush.msra.mxu0 0.0
    %1852 = vmatpush.msra.mxu0 0.0
    %1853 = vmatpush.msra.mxu0 0.0
    %1854 = vmatpush.msra.mxu0 0.0
    %1855 = vmatpush.msra.mxu0 0.0
    %1856 = vmatpush.msra.mxu0 0.0
    %1857 = vmatpush.msra.mxu0 0.0
    %v1858 = vand.u32 %v51, 4294901760
    %1859 = vmatpush.msra.mxu0 %v1858
    %v1860 = vand.u32 %v50, 4294901760
    %1861 = vmatpush.msra.mxu0 %v1860
    %v1862 = vand.u32 %v49, 4294901760
    %1863 = vmatpush.msra.mxu0 %v1862
    %v1864 = vand.u32 %v48, 4294901760
    %1865 = vmatpush.msra.mxu0 %v1864
    %v1866 = vand.u32 %v1684, 4294901760
    %1867 = vmatmul.f32.gmra.mxu0 %v1866
    %v1868 = vpop.f32.mrf.mxu0
    %v1869 = vadd.f32 %v1844, %v1868
    %1870 = vdwg.mxu0
    %v1871 = vadd.f32 %v1680, %v1869
    %v1872 = vxor.u32 %v1871, 2147483648
    %v1873 = vmul.f32 %v1872, 1.442695
    %v1874 = vpow.pop %v1873
    %v1875 = vadd.f32 %v1874, 1.0
    %v1876 = vrcp.pop %v1875
    %v1877 = vmul.f32 %v1875, %v1876
    %v1878 = vsub.f32 1.0, %v1877
    %v1879 = vmul.f32 %v1876, %v1878
    %v1880 = vadd.f32 %v1876, %v1879
    %vm1881 = vweird.f32 %v1875
    %vm1882 = vweird.f32 %v1876
    %vm1883 = vmor %vm1881, %vm1882
    %v1884 = vsel %vm1883, %v1876, %v1880
    %v1885 = vand.u32 2147483647, %v1875
    %vm1886 = vcmp.eq.f32.partialorder %v1885, 8.507059e+37
    %v1887 = vand.u32 %v1875, 2147483648
    %v1888 = vor.u32 1.1754944e-38, %v1887
    %v1889 = vsel %vm1886, %v1888, %v1884
    %v1890 = vmul.f32 1.0, %v1889
    %v1891 = vtanh.pop %v1871
    %v1892 = vmul.f32 %v1890, %v1672
    %1894 = vrot.lane.b32.xlu0 %v1891, 32
    %v1895 = vpop.permute.xlu0 %1894
    %v1897 = vmul.f32 %v1890, %v1895
    %1899 = vrot.lane.b32.xlu0 %v1897, 32
    %v1900 = vpop.permute.xlu0 %1899
    %v1902 = vadd.f32 %v1892, %v1900
    %v1903 = vtanh.pop %v1902
    %1905 = vrot.lane.b32.xlu0 %v1903, 32
    %v1906 = vpop.permute.xlu0 %1905
    %v1908 = vmul.f32 %v1890, %v1906
    %1910 = vrot.lane.b32.xlu0 %v1448, 96
    %v1911 = vpop.permute.xlu0 %1910
    %1914 = vrot.lane.b32.xlu0 %v1908, 32
    %v1915 = vpop.permute.xlu0 %1914
    %v1917 = vsel %vm55, %v1223, %v1911
    %v1918 = vsel %vm985, %v1917, %v1678
    %v1919 = vsel %vm987, %v1918, %v1915
    %s1920 = scalar_lea.vmem %s2, 2
    %1921 = vst [vmem:[%s1920] sm:$0x3] %v1919
    %1922 = vrot.lane.b32.xlu0 %v1908, 64
    %v1923 = vpop.permute.xlu0 %1922
    %vm1925 = vcmask 254976
    %1926 = vst.msk [vmem:[#allocation3] sm:$0x3] %vm1925, %v1923
    %1928 = vrot.lane.b32.xlu0 %v1902, 96
    %v1929 = vpop.permute.xlu0 %1928
    %1931 = vst.msk [vmem:[#allocation4] sm:$0x3] %vm1925, %v1929
    // Predicated region
    $region30: #{vanilla_lstm_forward.1} parent=1 // pred_check
      %p1932 = pneg %p14
    $region31: #{vanilla_lstm_forward.1} parent=1 // pred_check_branch
      %1934 = sbr.rel (%p1932) target = $region33
    $region32: #{vanilla_lstm_forward.1} parent=1 // pred_region
      %1935 = vst.msk [vmem:[#allocation5] sm:$0x3] %vm1925, %v1923
      %1936 = vst.msk [vmem:[#allocation7] sm:$0x3] %vm1925, %v1929
    $region33: #{vanilla_lstm_forward.1} parent=1 // pred_fallthru
      _
    // Predicated region
    $region34: #{vanilla_lstm_forward.1} parent=1 // pred_check
      _
    $region35: #{vanilla_lstm_forward.1} parent=1 // pred_check_branch
      %1938 = sbr.rel (0) target = $region37
    $region36: #{vanilla_lstm_forward.1} parent=1 // pred_region
      _
    $region37: #{vanilla_lstm_forward.1} parent=1 // pred_fallthru
      _
    // Predicated region
    $region38: #{vanilla_lstm_forward.1} parent=1 // pred_check
      _
    $region39: #{vanilla_lstm_forward.1} parent=1 // pred_check_branch
      %1940 = sbr.rel (0) target = $region41
    $region40: #{vanilla_lstm_forward.1} parent=1 // pred_region
      %1942 = vsyncadd [#allocation6], 0
      %s1944 = sshll.u32 [#allocation5], 4
      %s1945 = int_to_ptr.vmem [resolvable:$true] %s1944
      %s1946 = sshll.u32 %s3, 4
      %s1947 = int_to_ptr.hbm [resolvable:$true] %s1946
      %1949 = dma.vmem_to_hbm [thread:$0]  %s1945, 32, %s1947, [#allocation6]
    $region41: #{vanilla_lstm_forward.1} parent=1 // pred_fallthru
      _
    // Predicated region
    $region42: #{vanilla_lstm_forward.1} parent=1 // pred_check
      _
    $region43: #{vanilla_lstm_forward.1} parent=1 // pred_check_branch
      %1951 = sbr.rel (0) target = $region45
    $region44: #{vanilla_lstm_forward.1} parent=1 // pred_region
      %1953 = vsyncadd [#allocation8], 0
      %s1955 = sshll.u32 [#allocation7], 4
      %s1956 = int_to_ptr.vmem [resolvable:$true] %s1955
      %s1957 = sshll.u32 %s4, 4
      %s1958 = int_to_ptr.hbm [resolvable:$true] %s1957
      %1960 = dma.vmem_to_hbm [thread:$0]  %s1956, 32, %s1958, [#allocation8]
    $region45: #{vanilla_lstm_forward.1} parent=1 // pred_fallthru
      _
    // Predicated region
    $region46: #{vanilla_lstm_forward.1} parent=1 // pred_check
      _
    $region47: #{vanilla_lstm_forward.1} parent=1 // pred_check_branch
      %1962 = sbr.rel (0) target = $region49
    $region48: #{vanilla_lstm_forward.1} parent=1 // pred_region
      _
    $region49: #{vanilla_lstm_forward.1} parent=1 // pred_fallthru
      _
    // Predicated region
    $region50: #{vanilla_lstm_forward.1} parent=1 // pred_check
      _
    $region51: #{vanilla_lstm_forward.1} parent=1 // pred_check_branch
      %1964 = sbr.rel (0) target = $region53
    $region52: #{vanilla_lstm_forward.1} parent=1 // pred_region
      %1966 = dma.done [#allocation6], 32
    $region53: #{vanilla_lstm_forward.1} parent=1 // pred_fallthru
      _
    // Predicated region
    $region54: #{vanilla_lstm_forward.1} parent=1 // pred_check
      _
    $region55: #{vanilla_lstm_forward.1} parent=1 // pred_check_branch
      %1968 = sbr.rel (0) target = $region57
    $region56: #{vanilla_lstm_forward.1} parent=1 // pred_region
      %1970 = dma.done [#allocation8], 32
    $region57: #{vanilla_lstm_forward.1} parent=1 // pred_fallthru
      _
    %1971 = vsyncpa [#allocation6], 1
    %1972 = vsyncpa [#allocation8], 1

</llo_original>
